<compile_context>
chip_gen: v7x
topology: tpu7x:2x2x1
jax: 0.10.0
libtpu: 0.0.40
codegen_flags: <defaults>
</compile_context>

<pallas_src>
import functools

import jax
import jax.numpy as jnp
from jax.experimental import pallas as pl
from jax.experimental.pallas import tpu as pltpu

_LANES = 128
_GROUP = 3 * _LANES              # 384 lanes == 128 interleaved (x,y,z) joints per row
_MIN_TILE_ROWS = 16              # supports both f32 (8,128) and bf16 (16,128) tiling
_MAX_TILE_ROWS = 2048            # 2048 x 384 x 4B = 3 MiB per f32 input block
_FAST_PATH_MAX_JOINTS = 32 * 1024


def _cdiv(a, b):
    return (a + b - 1) // b


def _round_up(x, m):
    return ((x + m - 1) // m) * m


def _selection_matrix():
    # S[c, j] = 1.0 iff lane c of a 384-wide row belongs to joint j (c // 3 == j).
    c = jnp.arange(_GROUP)[:, None]
    j = jnp.arange(_LANES)[None, :]
    return (c // 3 == j).astype(jnp.float32)


def _per_joint_error(pred_ref, targ_ref, sel_ref):
    d = pred_ref[...].astype(jnp.float32) - targ_ref[...].astype(jnp.float32)
    d2 = d * d                                             # (TR, 384) dense VPU
    # Group-of-3 lane reduce + compaction in one idle-MXU matmul.  HIGHEST precision
    # keeps the f32 operand exact (exact 0/1 weights) — well within 1e-5 of the VPU sum.
    sq = jnp.dot(d2, sel_ref[...],
                 precision=jax.lax.Precision.HIGHEST,
                 preferred_element_type=jnp.float32)       # (TR, 128)
    return jnp.sqrt(sq)                                    # sqrt -> EUP (free slot)


def _mpjpe_joints_kernel(pred_ref, targ_ref, sel_ref, pj_ref):
    pj_ref[...] = _per_joint_error(pred_ref, targ_ref, sel_ref)


def _mpjpe_sum_kernel(pred_ref, targ_ref, sel_ref, psum_ref, *, valid_rows):
    pj = _per_joint_error(pred_ref, targ_ref, sel_ref)     # (TR, 128)
    if valid_rows is not None:
        # Last grid block may run past the array; mask the undefined rows out of the sum.
        tile_rows = pj.shape[0]
        row = pl.program_id(0) * tile_rows + jax.lax.broadcasted_iota(
            jnp.int32, pj.shape, 0)
        pj = jnp.where(row < valid_rows, pj, 0.0)
    psum_ref[...] = jnp.sum(pj, axis=0, keepdims=True)     # (1,128) per-lane partials


def _mpjpe_small(prediction, target, keep_joints, b, num_nodes):
    d = prediction.astype(jnp.float32) - target.astype(jnp.float32)
    pj = jnp.sqrt(jnp.sum(d * d, axis=-1)).reshape(b, num_nodes)
    return pj if keep_joints else jnp.mean(pj)


def mean_per_joint_position_error(prediction, target, keep_joints=False, *,
                                  force_pallas=False):
    """prediction, target: (B, num_nodes, 3) arrays (same as the torch module)."""
    b, num_nodes, num_dims = target.shape
    assert num_dims == 3
    total = b * num_nodes

    # Typical skeleton batches are tiny; a pallas_call only pays off at large totals.
    if total <= _FAST_PATH_MAX_JOINTS and not force_pallas:
        return _mpjpe_small(prediction, target, keep_joints, b, num_nodes)

    # Stream bf16 inputs as-is (halves HBM reads); everything else goes through f32.
    if prediction.dtype == jnp.bfloat16 and target.dtype == jnp.bfloat16:
        in_dtype = jnp.bfloat16
    else:
        in_dtype = jnp.float32

    pred_flat = prediction.astype(in_dtype).reshape(-1)    # natural interleaved order
    targ_flat = target.astype(in_dtype).reshape(-1)

    rows = _cdiv(total, _LANES)                            # 128 joints (384 lanes)/row
    padded_total = rows * _LANES
    if padded_total != total:
        # TODO(synk): this pad is one extra copy pass per input; it is only hit when the
        # joint count isn't a multiple of 128 (the (rows, 384) reshape requires it).
        pad = (padded_total - total) * 3
        pred_flat = jnp.pad(pred_flat, (0, pad))           # zero pad -> per-joint err 0
        targ_flat = jnp.pad(targ_flat, (0, pad))
    pred_t = pred_flat.reshape(rows, _GROUP)               # free row-major reshape
    targ_t = targ_flat.reshape(rows, _GROUP)

    # Tile selection: biggest tile under the cap, but with an even (>=2) grid-step count
    # when possible so v7x's two TensorCores both engage on the "parallel" axis.
    if rows <= _MIN_TILE_ROWS:
        tile_rows = rows
    else:
        n_steps = max(2, _cdiv(rows, _MAX_TILE_ROWS))
        n_steps += n_steps % 2
        tile_rows = min(_round_up(_cdiv(rows, n_steps), _MIN_TILE_ROWS), _MAX_TILE_ROWS)
    grid = _cdiv(rows, tile_rows)

    sel = _selection_matrix()
    in_specs = [
        pl.BlockSpec((tile_rows, _GROUP), lambda i: (i, 0)),
        pl.BlockSpec((tile_rows, _GROUP), lambda i: (i, 0)),
        pl.BlockSpec((_GROUP, _LANES), lambda i: (0, 0)),  # constant; loaded once
    ]
    cparams = pltpu.CompilerParams(
        dimension_semantics=("parallel",),                 # shard steps across v7x TCs
        vmem_limit_bytes=32 * 1024 * 1024,                 # ~14.5 MiB resident @ max tile
    )

    if keep_joints:
        pj = pl.pallas_call(
            _mpjpe_joints_kernel,
            out_shape=jax.ShapeDtypeStruct((rows, _LANES), jnp.float32),
            grid_spec=pltpu.PrefetchScalarGridSpec(
                num_scalar_prefetch=0,
                grid=(grid,),
                in_specs=in_specs,
                out_specs=pl.BlockSpec((tile_rows, _LANES), lambda i: (i, 0)),
            ),
            compiler_params=cparams,
        )(pred_t, targ_t, sel)
        # Lane-dense slab is already in flat joint order: joint = row * 128 + lane.
        return pj.reshape(rows * _LANES)[:total].reshape(b, num_nodes)

    # mean-only path: no (B,N) HBM writeback, just per-block per-lane partial sums.
    valid_rows = None if rows % tile_rows == 0 else rows
    psums = pl.pallas_call(
        functools.partial(_mpjpe_sum_kernel, valid_rows=valid_rows),
        out_shape=jax.ShapeDtypeStruct((1, grid * _LANES), jnp.float32),
        grid_spec=pltpu.PrefetchScalarGridSpec(
            num_scalar_prefetch=0,
            grid=(grid,),
            in_specs=in_specs,
            out_specs=pl.BlockSpec((1, _LANES), lambda i: (0, i)),
        ),
        compiler_params=cparams,
    )(pred_t, targ_t, sel)
    return jnp.sum(psums) / jnp.float32(total)             # divide by TRUE joint count


if __name__ == "__main__":
    key = jax.random.PRNGKey(0)

    def _check(B, N, k, dtype=jnp.float32, tol=1e-5):
        k1, k2 = jax.random.split(k)
        prediction = jax.random.normal(k1, (B, N, 3), dtype=jnp.float32).astype(dtype)
        target = jax.random.normal(k2, (B, N, 3), dtype=jnp.float32).astype(dtype)

        ref_joints = jnp.linalg.norm(
            prediction.astype(jnp.float32).reshape(-1, 3)
            - target.astype(jnp.float32).reshape(-1, 3), axis=1).reshape(B, N)
        ref_mean = jnp.mean(ref_joints)

        for force in (False, True):                        # jnp fast path + Pallas path
            out_mean = jax.block_until_ready(
                mean_per_joint_position_error(prediction, target,
                                              keep_joints=False, force_pallas=force))
            out_joints = jax.block_until_ready(
                mean_per_joint_position_error(prediction, target,
                                              keep_joints=True, force_pallas=force))
            assert out_joints.shape == (B, N)
            assert jnp.allclose(out_joints, ref_joints, atol=tol, rtol=tol)
            assert jnp.allclose(out_mean, ref_mean, atol=tol, rtol=tol)

    ks = jax.random.split(key, 4)
    _check(2, 16, ks[0])                          # typical skeleton batch, single tile
    _check(4, 25, ks[1])                          # joint count not a multiple of 128
    _check(3, 700, ks[2])                         # multi-step grid + partial last block
    _check(20, 700, ks[3], dtype=jnp.bfloat16)    # bf16 streaming path, masked last block

    print("KERNEL_OK")
</pallas_src>

<mosaic_0001>
module attributes {stable_mosaic.version = 11 : i64} {
  func.func @_mpjpe_sum_kernel(%arg0: i32, %arg1: memref<1x384xf32, #tpu.memory_space<vmem>>, %arg2: memref<1x384xf32, #tpu.memory_space<vmem>>, %arg3: memref<384x128xf32, #tpu.memory_space<vmem>>, %arg4: memref<1x128xf32, #tpu.memory_space<vmem>>) attributes {dimension_semantics = [#tpu.dimension_semantics<parallel>], iteration_bounds = array<i64: 1>, scalar_prefetch = 0 : i64, scratch_operands = 0 : i64, tpu.core_type = #tpu.core_type<tc>, window_params = [{transform_indices = @transform_0, window_bounds = array<i64: 1, 384>}, {transform_indices = @transform_1, window_bounds = array<i64: 1, 384>}, {pipeline_mode = #tpu.pipeline_mode<synchronous>, transform_indices = @transform_2, window_bounds = array<i64: 384, 128>}, {transform_indices = @transform_3, window_bounds = array<i64: 1, 128>}]} {
    %c0 = arith.constant 0 : index
    %c0_0 = arith.constant 0 : index
    %0 = vector.load %arg1[%c0, %c0_0] : memref<1x384xf32, #tpu.memory_space<vmem>>, vector<1x384xf32>
    %c0_1 = arith.constant 0 : index
    %c0_2 = arith.constant 0 : index
    %1 = vector.load %arg2[%c0_1, %c0_2] : memref<1x384xf32, #tpu.memory_space<vmem>>, vector<1x384xf32>
    %2 = arith.subf %0, %1 : vector<1x384xf32>
    %3 = arith.mulf %2, %2 : vector<1x384xf32>
    %c0_3 = arith.constant 0 : index
    %c0_4 = arith.constant 0 : index
    %4 = vector.load %arg3[%c0_3, %c0_4] : memref<384x128xf32, #tpu.memory_space<vmem>>, vector<384x128xf32>
    %cst = arith.constant dense<0.000000e+00> : vector<1x128xf32>
    %5 = tpu.matmul %3, %4, %cst {dimension_numbers = #tpu.dot_dimension_numbers<[1], [0], [0], [1], [0, 0, 1, 1], [], []>, precision = #tpu.contract_precision<fp32>} : vector<1x384xf32>, vector<384x128xf32>, vector<1x128xf32> -> vector<1x128xf32>
    %6 = math.sqrt %5 : vector<1x128xf32>
    %cst_5 = arith.constant dense<0.000000e+00> : vector<128xf32>
    %7 = vector.multi_reduction <add>, %6, %cst_5 [0] : vector<1x128xf32> to vector<128xf32>
    %8 = vector.shape_cast %7 : vector<128xf32> to vector<1x128xf32>
    %c0_6 = arith.constant 0 : index
    %c0_7 = arith.constant 0 : index
    %9 = vector.load %arg4[%c0_6, %c0_7] : memref<1x128xf32, #tpu.memory_space<vmem>>, vector<1x128xf32>
    tpu.vector_store %arg4[%c0_6, %c0_7], %8 {strides = array<i32>} : memref<1x128xf32, #tpu.memory_space<vmem>>, vector<1x128xf32>,
    return
  }
  func.func @transform_0(%arg0: i32) -> (i32, i32) {
    %c0_i32 = arith.constant 0 : i32
    %c0_i32_0 = arith.constant 0 : i32
    return %arg0, %c0_i32 : i32, i32
  }
  func.func @transform_1(%arg0: i32) -> (i32, i32) {
    %c0_i32 = arith.constant 0 : i32
    %c0_i32_0 = arith.constant 0 : i32
    return %arg0, %c0_i32 : i32, i32
  }
  func.func @transform_2(%arg0: i32) -> (i32, i32) {
    %c0_i32 = arith.constant 0 : i32
    %c0_i32_0 = arith.constant 0 : i32
    %c0_i32_1 = arith.constant 0 : i32
    return %c0_i32, %c0_i32_0 : i32, i32
  }
  func.func @transform_3(%arg0: i32) -> (i32, i32) {
    %c0_i32 = arith.constant 0 : i32
    %c0_i32_0 = arith.constant 0 : i32
    return %c0_i32, %arg0 : i32, i32
  }
}

</mosaic_0001>

<llo_original>
// kernel: tpu_custom_call.1
$region0: #{tpu_custom_call.1}
  #allocation0 [shape = 'u32[]', space=smem, size = 0x4, offset = 0x4, fixed_abs, tag = 'smem constant byte address 0x4 - core index']
  #allocation1 [shape = 'u32[144,128]{1,0:T(1,128)}', space=vmem, size = 0x12000, scoped, tag = 'internal scratch']
  %s0 = inlined_call_operand.hbm [shape: f32[1,384], index: 0, kind: input, shape index: {}]
  %s1 = inlined_call_operand.vmem [shape: f32[1,384], index: 1, kind: input, shape index: {}]
  %s2 = inlined_call_operand.hbm [shape: f32[384,128], index: 2, kind: input, shape index: {}]
  %s3 = inlined_call_operand.hbm [shape: f32[1,128], index: 3, kind: output, shape index: {}]
  %s4 = sld [smem:[#allocation0]]
  $region30: #{tpu_custom_call.1} parent=0
    _
  %s6 = ssub.s32 1, %s4
  %s7 = scalar_select 0, %s6, %s4
  $region1: #{tpu_custom_call.1} parent=0
    #allocation2 [shape = 'u8[1536]{0}', space=vmem, size = 0x800, scoped, tag = 'input window, operand 0, single buffered']
    #allocation3 [shape = 's32[1]{0}', space=sflag, size = 0x4, scoped, tag = 'scoped memory for tpu_custom_call.1']
    #allocation4 [shape = 's32[1]{0}', space=sflag, size = 0x4, scoped, tag = 'scoped memory for tpu_custom_call.1']
    #allocation5 [shape = 'u8[196608]{0}', space=vmem, size = 0x30000, scoped, tag = 'input window, operand 2, single buffered']
    #allocation6 [shape = 's32[1]{0}', space=sflag, size = 0x4, scoped, tag = 'scoped memory for tpu_custom_call.1']
    #allocation7 [shape = 'u8[512]{0}', space=vmem, size = 0x400, scoped, tag = 'output window, operand 0, single buffered']
    %8 = vsyncpa [#allocation3], 0
    %9 = vsyncpa [#allocation6], 0
    %10 = vsyncpa [#allocation4], 0
    // Predicated region
    $region2: #{tpu_custom_call.1} parent=1 // pred_check
      _
    $region3: #{tpu_custom_call.1} parent=1 // pred_check_branch
      %12 = sbr.rel (0) target = $region5
    $region4: #{tpu_custom_call.1} parent=1 // pred_region
      %s14 = ssub.s32 48, 48
      %15 = vsyncadd [#allocation3], %s14
      %s17 = sshll.u32 [#allocation2], 4
      %s18 = int_to_ptr.vmem [resolvable:$true] %s17
      %20 = dma.hbm_to_vmem [thread:$0]  %s0, 48, %s18, [#allocation3]
    $region5: #{tpu_custom_call.1} parent=1 // pred_fallthru
      _
    // Predicated region
    $region6: #{tpu_custom_call.1} parent=1 // pred_check
      _
    $region7: #{tpu_custom_call.1} parent=1 // pred_check_branch
      %22 = sbr.rel (0) target = $region9
    $region8: #{tpu_custom_call.1} parent=1 // pred_region
      _
    $region9: #{tpu_custom_call.1} parent=1 // pred_fallthru
      _
    // Predicated region
    $region10: #{tpu_custom_call.1} parent=1 // pred_check
      _
    $region11: #{tpu_custom_call.1} parent=1 // pred_check_branch
      %24 = sbr.rel (0) target = $region13
    $region12: #{tpu_custom_call.1} parent=1 // pred_region
      %s26 = ssub.s32 6144, 6144
      %27 = vsyncadd [#allocation6], %s26
      %s28 = sshll.u32 [#allocation5], 4
      %s29 = int_to_ptr.vmem [resolvable:$true] %s28
      %34 = dma.hbm_to_vmem [thread:$0]  %s2, 6144, %s29, [#allocation6], 128, 128, 8
    $region13: #{tpu_custom_call.1} parent=1 // pred_fallthru
      _
    // Predicated region
    $region14: #{tpu_custom_call.1} parent=1 // pred_check
      _
    $region15: #{tpu_custom_call.1} parent=1 // pred_check_branch
      %36 = sbr.rel (0) target = $region17
    $region16: #{tpu_custom_call.1} parent=1 // pred_region
      %37 = dma.done [#allocation3], 48
    $region17: #{tpu_custom_call.1} parent=1 // pred_fallthru
      _
    // Predicated region
    $region18: #{tpu_custom_call.1} parent=1 // pred_check
      _
    $region19: #{tpu_custom_call.1} parent=1 // pred_check_branch
      %39 = sbr.rel (0) target = $region21
    $region20: #{tpu_custom_call.1} parent=1 // pred_region
      %40 = dma.done [#allocation6], 6144
    $region21: #{tpu_custom_call.1} parent=1 // pred_fallthru
      _
    %v41 = vld [vmem:[#allocation2] sm:$0x7]
    %v42 = vld [vmem:[%s1] sm:$0x7]
    %v43 = vsub.f32 %v41, %v42
    %v44 = vmul.f32 %v43, %v43
    %v45 = vld [vmem:[#allocation5] sm:$0xff]
    %v46 = vld [vmem:[#allocation5 + $0x8] sm:$0xff]
    %v47 = vld [vmem:[#allocation5 + $0x10] sm:$0xff]
    %v48 = vld [vmem:[#allocation5 + $0x18] sm:$0xff]
    %v49 = vld [vmem:[#allocation5 + $0x20] sm:$0xff]
    %v50 = vld [vmem:[#allocation5 + $0x28] sm:$0xff]
    %v51 = vld [vmem:[#allocation5 + $0x30] sm:$0xff]
    %v52 = vld [vmem:[#allocation5 + $0x38] sm:$0xff]
    %v53 = vld [vmem:[#allocation5 + $0x40] sm:$0xff]
    %v54 = vld [vmem:[#allocation5 + $0x48] sm:$0xff]
    %v55 = vld [vmem:[#allocation5 + $0x50] sm:$0xff]
    %v56 = vld [vmem:[#allocation5 + $0x58] sm:$0xff]
    %v57 = vld [vmem:[#allocation5 + $0x60] sm:$0xff]
    %v58 = vld [vmem:[#allocation5 + $0x68] sm:$0xff]
    %v59 = vld [vmem:[#allocation5 + $0x70] sm:$0xff]
    %v60 = vld [vmem:[#allocation5 + $0x78] sm:$0xff]
    %v61 = vld [vmem:[#allocation5 + $0x80] sm:$0xff]
    %v62 = vld [vmem:[#allocation5 + $0x88] sm:$0xff]
    %v63 = vld [vmem:[#allocation5 + $0x90] sm:$0xff]
    %v64 = vld [vmem:[#allocation5 + $0x98] sm:$0xff]
    %v65 = vld [vmem:[#allocation5 + $0xa0] sm:$0xff]
    %v66 = vld [vmem:[#allocation5 + $0xa8] sm:$0xff]
    %v67 = vld [vmem:[#allocation5 + $0xb0] sm:$0xff]
    %v68 = vld [vmem:[#allocation5 + $0xb8] sm:$0xff]
    %v69 = vld [vmem:[#allocation5 + $0xc0] sm:$0xff]
    %v70 = vld [vmem:[#allocation5 + $0xc8] sm:$0xff]
    %v71 = vld [vmem:[#allocation5 + $0xd0] sm:$0xff]
    %v72 = vld [vmem:[#allocation5 + $0xd8] sm:$0xff]
    %v73 = vld [vmem:[#allocation5 + $0xe0] sm:$0xff]
    %v74 = vld [vmem:[#allocation5 + $0xe8] sm:$0xff]
    %v75 = vld [vmem:[#allocation5 + $0xf0] sm:$0xff]
    %v76 = vld [vmem:[#allocation5 + $0xf8] sm:$0xff]
    %v77 = vld [vmem:[#allocation5 + $0x100] sm:$0xff]
    %v78 = vld [vmem:[#allocation5 + $0x108] sm:$0xff]
    %v79 = vld [vmem:[#allocation5 + $0x110] sm:$0xff]
    %v80 = vld [vmem:[#allocation5 + $0x118] sm:$0xff]
    %v81 = vld [vmem:[#allocation5 + $0x120] sm:$0xff]
    %v82 = vld [vmem:[#allocation5 + $0x128] sm:$0xff]
    %v83 = vld [vmem:[#allocation5 + $0x130] sm:$0xff]
    %v84 = vld [vmem:[#allocation5 + $0x138] sm:$0xff]
    %v85 = vld [vmem:[#allocation5 + $0x140] sm:$0xff]
    %v86 = vld [vmem:[#allocation5 + $0x148] sm:$0xff]
    %v87 = vld [vmem:[#allocation5 + $0x150] sm:$0xff]
    %v88 = vld [vmem:[#allocation5 + $0x158] sm:$0xff]
    %v89 = vld [vmem:[#allocation5 + $0x160] sm:$0xff]
    %v90 = vld [vmem:[#allocation5 + $0x168] sm:$0xff]
    %v91 = vld [vmem:[#allocation5 + $0x170] sm:$0xff]
    %v92 = vld [vmem:[#allocation5 + $0x178] sm:$0xff]
    %v94 = vlaneseq
    %v95 = vshrl.u32 %v94, 7
    %v96 = vsub.s32 0, %v95
    %v97 = vrot.slane %v44, %v96
    %v98 = vlaneseq
    %v99 = vshrl.u32 %v98, 7
    %v100 = vsub.s32 1, %v99
    %v101 = vrot.slane %v44, %v100
    %v102 = vlaneseq
    %v103 = vshrl.u32 %v102, 7
    %v104 = vsub.s32 2, %v103
    %v105 = vrot.slane %v44, %v104
    %109 = vmatprep.subr.mxu0 0.0
    %v110 = vand.u32 %v45, 4294901760
    %111 = vmatpush1.msra.mxu0 %v110
    %112 = vmatprep.subr.mxu0 0.0
    %v113 = vand.u32 %v46, 4294901760
    %114 = vmatpush1.msra.mxu0 %v113
    %115 = vmatprep.subr.mxu0 0.0
    %v116 = vand.u32 %v47, 4294901760
    %117 = vmatpush1.msra.mxu0 %v116
    %118 = vmatprep.subr.mxu0 0.0
    %v119 = vand.u32 %v48, 4294901760
    %120 = vmatpush1.msra.mxu0 %v119
    %121 = vmatprep.subr.mxu0 0.0
    %v122 = vand.u32 %v49, 4294901760
    %123 = vmatpush1.msra.mxu0 %v122
    %124 = vmatprep.subr.mxu0 0.0
    %v125 = vand.u32 %v50, 4294901760
    %126 = vmatpush1.msra.mxu0 %v125
    %127 = vmatprep.subr.mxu0 0.0
    %v128 = vand.u32 %v51, 4294901760
    %129 = vmatpush1.msra.mxu0 %v128
    %130 = vmatprep.subr.mxu0 0.0
    %v131 = vand.u32 %v52, 4294901760
    %132 = vmatpush1.msra.mxu0 %v131
    %133 = vmatprep.subr.mxu0 0.0
    %v134 = vand.u32 %v53, 4294901760
    %135 = vmatpush1.msra.mxu0 %v134
    %136 = vmatprep.subr.mxu0 0.0
    %v137 = vand.u32 %v54, 4294901760
    %138 = vmatpush1.msra.mxu0 %v137
    %139 = vmatprep.subr.mxu0 0.0
    %v140 = vand.u32 %v55, 4294901760
    %141 = vmatpush1.msra.mxu0 %v140
    %142 = vmatprep.subr.mxu0 0.0
    %v143 = vand.u32 %v56, 4294901760
    %144 = vmatpush1.msra.mxu0 %v143
    %145 = vmatprep.subr.mxu0 0.0
    %v146 = vand.u32 %v57, 4294901760
    %147 = vmatpush1.msra.mxu0 %v146
    %148 = vmatprep.subr.mxu0 0.0
    %v149 = vand.u32 %v58, 4294901760
    %150 = vmatpush1.msra.mxu0 %v149
    %151 = vmatprep.subr.mxu0 0.0
    %v152 = vand.u32 %v59, 4294901760
    %153 = vmatpush1.msra.mxu0 %v152
    %154 = vmatprep.subr.mxu0 0.0
    %v155 = vand.u32 %v60, 4294901760
    %156 = vmatpush1.msra.mxu0 %v155
    %157 = vmatprep.subr.mxu0 0.0
    %v158 = vand.u32 %v61, 4294901760
    %159 = vmatpush1.msra.mxu0 %v158
    %160 = vmatprep.subr.mxu0 0.0
    %v161 = vand.u32 %v62, 4294901760
    %162 = vmatpush1.msra.mxu0 %v161
    %163 = vmatprep.subr.mxu0 0.0
    %v164 = vand.u32 %v63, 4294901760
    %165 = vmatpush1.msra.mxu0 %v164
    %166 = vmatprep.subr.mxu0 0.0
    %v167 = vand.u32 %v64, 4294901760
    %168 = vmatpush1.msra.mxu0 %v167
    %169 = vmatprep.subr.mxu0 0.0
    %v170 = vand.u32 %v65, 4294901760
    %171 = vmatpush1.msra.mxu0 %v170
    %172 = vmatprep.subr.mxu0 0.0
    %v173 = vand.u32 %v66, 4294901760
    %174 = vmatpush1.msra.mxu0 %v173
    %175 = vmatprep.subr.mxu0 0.0
    %v176 = vand.u32 %v67, 4294901760
    %177 = vmatpush1.msra.mxu0 %v176
    %178 = vmatprep.subr.mxu0 0.0
    %v179 = vand.u32 %v68, 4294901760
    %180 = vmatpush1.msra.mxu0 %v179
    %181 = vmatprep.subr.mxu0 0.0
    %v182 = vand.u32 %v69, 4294901760
    %183 = vmatpush1.msra.mxu0 %v182
    %184 = vmatprep.subr.mxu0 0.0
    %v185 = vand.u32 %v70, 4294901760
    %186 = vmatpush1.msra.mxu0 %v185
    %187 = vmatprep.subr.mxu0 0.0
    %v188 = vand.u32 %v71, 4294901760
    %189 = vmatpush1.msra.mxu0 %v188
    %190 = vmatprep.subr.mxu0 0.0
    %v191 = vand.u32 %v72, 4294901760
    %192 = vmatpush1.msra.mxu0 %v191
    %193 = vmatprep.subr.mxu0 0.0
    %v194 = vand.u32 %v73, 4294901760
    %195 = vmatpush1.msra.mxu0 %v194
    %196 = vmatprep.subr.mxu0 0.0
    %v197 = vand.u32 %v74, 4294901760
    %198 = vmatpush1.msra.mxu0 %v197
    %199 = vmatprep.subr.mxu0 0.0
    %v200 = vand.u32 %v75, 4294901760
    %201 = vmatpush1.msra.mxu0 %v200
    %202 = vmatprep.subr.mxu0 0.0
    %v203 = vand.u32 %v76, 4294901760
    %204 = vmatpush1.msra.mxu0 %v203
    %v205 = vand.u32 %v101, 4294901760
    %v206 = vsub.f32 %v101, %v205
    %v207 = vand.u32 %v206, 4294901760
    %v208 = vsub.f32 %v206, %v207
    %v209 = vand.u32 %v208, 4294901760
    %210 = vmatprep.mubr.f32.mxu0 %v209
    %v211 = vand.u32 %v97, 4294901760
    %v212 = vsub.f32 %v97, %v211
    %v213 = vand.u32 %v212, 4294901760
    %v214 = vsub.f32 %v212, %v213
    %v215 = vand.u32 %v214, 4294901760
    %216 = vmatmul.mubr.f32.gmra.mrb[0].mxu0 %v215
    %v217 = vpop.f32.mrb[0].mxu0
    %v218 = vadd.f32 0.0, %v217
    %v219 = vpop.f32.mrb[0].mxu0
    %220 = vdwg.mxu0
    %221 = vmatprep.subr.mxu0 0.0
    %v222 = vand.u32 %v45, 4294901760
    %v223 = vsub.f32 %v45, %v222
    %v224 = vand.u32 %v223, 4294901760
    %v225 = vsub.f32 %v223, %v224
    %v226 = vand.u32 %v225, 4294901760
    %227 = vmatpush1.msra.mxu0 %v226
    %228 = vmatprep.subr.mxu0 0.0
    %v229 = vand.u32 %v46, 4294901760
    %v230 = vsub.f32 %v46, %v229
    %v231 = vand.u32 %v230, 4294901760
    %v232 = vsub.f32 %v230, %v231
    %v233 = vand.u32 %v232, 4294901760
    %234 = vmatpush1.msra.mxu0 %v233
    %235 = vmatprep.subr.mxu0 0.0
    %v236 = vand.u32 %v47, 4294901760
    %v237 = vsub.f32 %v47, %v236
    %v238 = vand.u32 %v237, 4294901760
    %v239 = vsub.f32 %v237, %v238
    %v240 = vand.u32 %v239, 4294901760
    %241 = vmatpush1.msra.mxu0 %v240
    %242 = vmatprep.subr.mxu0 0.0
    %v243 = vand.u32 %v48, 4294901760
    %v244 = vsub.f32 %v48, %v243
    %v245 = vand.u32 %v244, 4294901760
    %v246 = vsub.f32 %v244, %v245
    %v247 = vand.u32 %v246, 4294901760
    %248 = vmatpush1.msra.mxu0 %v247
    %249 = vmatprep.subr.mxu0 0.0
    %v250 = vand.u32 %v49, 4294901760
    %v251 = vsub.f32 %v49, %v250
    %v252 = vand.u32 %v251, 4294901760
    %v253 = vsub.f32 %v251, %v252
    %v254 = vand.u32 %v253, 4294901760
    %255 = vmatpush1.msra.mxu0 %v254
    %256 = vmatprep.subr.mxu0 0.0
    %v257 = vand.u32 %v50, 4294901760
    %v258 = vsub.f32 %v50, %v257
    %v259 = vand.u32 %v258, 4294901760
    %v260 = vsub.f32 %v258, %v259
    %v261 = vand.u32 %v260, 4294901760
    %262 = vmatpush1.msra.mxu0 %v261
    %263 = vmatprep.subr.mxu0 0.0
    %v264 = vand.u32 %v51, 4294901760
    %v265 = vsub.f32 %v51, %v264
    %v266 = vand.u32 %v265, 4294901760
    %v267 = vsub.f32 %v265, %v266
    %v268 = vand.u32 %v267, 4294901760
    %269 = vmatpush1.msra.mxu0 %v268
    %270 = vmatprep.subr.mxu0 0.0
    %v271 = vand.u32 %v52, 4294901760
    %v272 = vsub.f32 %v52, %v271
    %v273 = vand.u32 %v272, 4294901760
    %v274 = vsub.f32 %v272, %v273
    %v275 = vand.u32 %v274, 4294901760
    %276 = vmatpush1.msra.mxu0 %v275
    %277 = vmatprep.subr.mxu0 0.0
    %v278 = vand.u32 %v53, 4294901760
    %v279 = vsub.f32 %v53, %v278
    %v280 = vand.u32 %v279, 4294901760
    %v281 = vsub.f32 %v279, %v280
    %v282 = vand.u32 %v281, 4294901760
    %283 = vmatpush1.msra.mxu0 %v282
    %284 = vmatprep.subr.mxu0 0.0
    %v285 = vand.u32 %v54, 4294901760
    %v286 = vsub.f32 %v54, %v285
    %v287 = vand.u32 %v286, 4294901760
    %v288 = vsub.f32 %v286, %v287
    %v289 = vand.u32 %v288, 4294901760
    %290 = vmatpush1.msra.mxu0 %v289
    %291 = vmatprep.subr.mxu0 0.0
    %v292 = vand.u32 %v55, 4294901760
    %v293 = vsub.f32 %v55, %v292
    %v294 = vand.u32 %v293, 4294901760
    %v295 = vsub.f32 %v293, %v294
    %v296 = vand.u32 %v295, 4294901760
    %297 = vmatpush1.msra.mxu0 %v296
    %298 = vmatprep.subr.mxu0 0.0
    %v299 = vand.u32 %v56, 4294901760
    %v300 = vsub.f32 %v56, %v299
    %v301 = vand.u32 %v300, 4294901760
    %v302 = vsub.f32 %v300, %v301
    %v303 = vand.u32 %v302, 4294901760
    %304 = vmatpush1.msra.mxu0 %v303
    %305 = vmatprep.subr.mxu0 0.0
    %v306 = vand.u32 %v57, 4294901760
    %v307 = vsub.f32 %v57, %v306
    %v308 = vand.u32 %v307, 4294901760
    %v309 = vsub.f32 %v307, %v308
    %v310 = vand.u32 %v309, 4294901760
    %311 = vmatpush1.msra.mxu0 %v310
    %312 = vmatprep.subr.mxu0 0.0
    %v313 = vand.u32 %v58, 4294901760
    %v314 = vsub.f32 %v58, %v313
    %v315 = vand.u32 %v314, 4294901760
    %v316 = vsub.f32 %v314, %v315
    %v317 = vand.u32 %v316, 4294901760
    %318 = vmatpush1.msra.mxu0 %v317
    %319 = vmatprep.subr.mxu0 0.0
    %v320 = vand.u32 %v59, 4294901760
    %v321 = vsub.f32 %v59, %v320
    %v322 = vand.u32 %v321, 4294901760
    %v323 = vsub.f32 %v321, %v322
    %v324 = vand.u32 %v323, 4294901760
    %325 = vmatpush1.msra.mxu0 %v324
    %326 = vmatprep.subr.mxu0 0.0
    %v327 = vand.u32 %v60, 4294901760
    %v328 = vsub.f32 %v60, %v327
    %v329 = vand.u32 %v328, 4294901760
    %v330 = vsub.f32 %v328, %v329
    %v331 = vand.u32 %v330, 4294901760
    %332 = vmatpush1.msra.mxu0 %v331
    %333 = vmatprep.subr.mxu0 0.0
    %v334 = vand.u32 %v61, 4294901760
    %v335 = vsub.f32 %v61, %v334
    %v336 = vand.u32 %v335, 4294901760
    %v337 = vsub.f32 %v335, %v336
    %v338 = vand.u32 %v337, 4294901760
    %339 = vmatpush1.msra.mxu0 %v338
    %340 = vmatprep.subr.mxu0 0.0
    %v341 = vand.u32 %v62, 4294901760
    %v342 = vsub.f32 %v62, %v341
    %v343 = vand.u32 %v342, 4294901760
    %v344 = vsub.f32 %v342, %v343
    %v345 = vand.u32 %v344, 4294901760
    %346 = vmatpush1.msra.mxu0 %v345
    %347 = vmatprep.subr.mxu0 0.0
    %v348 = vand.u32 %v63, 4294901760
    %v349 = vsub.f32 %v63, %v348
    %v350 = vand.u32 %v349, 4294901760
    %v351 = vsub.f32 %v349, %v350
    %v352 = vand.u32 %v351, 4294901760
    %353 = vmatpush1.msra.mxu0 %v352
    %354 = vmatprep.subr.mxu0 0.0
    %v355 = vand.u32 %v64, 4294901760
    %v356 = vsub.f32 %v64, %v355
    %v357 = vand.u32 %v356, 4294901760
    %v358 = vsub.f32 %v356, %v357
    %v359 = vand.u32 %v358, 4294901760
    %360 = vmatpush1.msra.mxu0 %v359
    %361 = vmatprep.subr.mxu0 0.0
    %v362 = vand.u32 %v65, 4294901760
    %v363 = vsub.f32 %v65, %v362
    %v364 = vand.u32 %v363, 4294901760
    %v365 = vsub.f32 %v363, %v364
    %v366 = vand.u32 %v365, 4294901760
    %367 = vmatpush1.msra.mxu0 %v366
    %368 = vmatprep.subr.mxu0 0.0
    %v369 = vand.u32 %v66, 4294901760
    %v370 = vsub.f32 %v66, %v369
    %v371 = vand.u32 %v370, 4294901760
    %v372 = vsub.f32 %v370, %v371
    %v373 = vand.u32 %v372, 4294901760
    %374 = vmatpush1.msra.mxu0 %v373
    %375 = vmatprep.subr.mxu0 0.0
    %v376 = vand.u32 %v67, 4294901760
    %v377 = vsub.f32 %v67, %v376
    %v378 = vand.u32 %v377, 4294901760
    %v379 = vsub.f32 %v377, %v378
    %v380 = vand.u32 %v379, 4294901760
    %381 = vmatpush1.msra.mxu0 %v380
    %382 = vmatprep.subr.mxu0 0.0
    %v383 = vand.u32 %v68, 4294901760
    %v384 = vsub.f32 %v68, %v383
    %v385 = vand.u32 %v384, 4294901760
    %v386 = vsub.f32 %v384, %v385
    %v387 = vand.u32 %v386, 4294901760
    %388 = vmatpush1.msra.mxu0 %v387
    %389 = vmatprep.subr.mxu0 0.0
    %v390 = vand.u32 %v69, 4294901760
    %v391 = vsub.f32 %v69, %v390
    %v392 = vand.u32 %v391, 4294901760
    %v393 = vsub.f32 %v391, %v392
    %v394 = vand.u32 %v393, 4294901760
    %395 = vmatpush1.msra.mxu0 %v394
    %396 = vmatprep.subr.mxu0 0.0
    %v397 = vand.u32 %v70, 4294901760
    %v398 = vsub.f32 %v70, %v397
    %v399 = vand.u32 %v398, 4294901760
    %v400 = vsub.f32 %v398, %v399
    %v401 = vand.u32 %v400, 4294901760
    %402 = vmatpush1.msra.mxu0 %v401
    %403 = vmatprep.subr.mxu0 0.0
    %v404 = vand.u32 %v71, 4294901760
    %v405 = vsub.f32 %v71, %v404
    %v406 = vand.u32 %v405, 4294901760
    %v407 = vsub.f32 %v405, %v406
    %v408 = vand.u32 %v407, 4294901760
    %409 = vmatpush1.msra.mxu0 %v408
    %410 = vmatprep.subr.mxu0 0.0
    %v411 = vand.u32 %v72, 4294901760
    %v412 = vsub.f32 %v72, %v411
    %v413 = vand.u32 %v412, 4294901760
    %v414 = vsub.f32 %v412, %v413
    %v415 = vand.u32 %v414, 4294901760
    %416 = vmatpush1.msra.mxu0 %v415
    %417 = vmatprep.subr.mxu0 0.0
    %v418 = vand.u32 %v73, 4294901760
    %v419 = vsub.f32 %v73, %v418
    %v420 = vand.u32 %v419, 4294901760
    %v421 = vsub.f32 %v419, %v420
    %v422 = vand.u32 %v421, 4294901760
    %423 = vmatpush1.msra.mxu0 %v422
    %424 = vmatprep.subr.mxu0 0.0
    %v425 = vand.u32 %v74, 4294901760
    %v426 = vsub.f32 %v74, %v425
    %v427 = vand.u32 %v426, 4294901760
    %v428 = vsub.f32 %v426, %v427
    %v429 = vand.u32 %v428, 4294901760
    %430 = vmatpush1.msra.mxu0 %v429
    %431 = vmatprep.subr.mxu0 0.0
    %v432 = vand.u32 %v75, 4294901760
    %v433 = vsub.f32 %v75, %v432
    %v434 = vand.u32 %v433, 4294901760
    %v435 = vsub.f32 %v433, %v434
    %v436 = vand.u32 %v435, 4294901760
    %437 = vmatpush1.msra.mxu0 %v436
    %438 = vmatprep.subr.mxu0 0.0
    %v439 = vand.u32 %v76, 4294901760
    %v440 = vsub.f32 %v76, %v439
    %v441 = vand.u32 %v440, 4294901760
    %v442 = vsub.f32 %v440, %v441
    %v443 = vand.u32 %v442, 4294901760
    %444 = vmatpush1.msra.mxu0 %v443
    %v445 = vand.u32 %v101, 4294901760
    %446 = vmatprep.mubr.f32.mxu0 %v445
    %v447 = vand.u32 %v97, 4294901760
    %448 = vmatmul.mubr.f32.gmra.mrb[0].mxu0 %v447
    %v449 = vpop.f32.mrb[0].mxu0
    %v450 = vadd.f32 %v218, %v449
    %v451 = vpop.f32.mrb[0].mxu0
    %452 = vdwg.mxu0
    %453 = vmatprep.subr.mxu0 0.0
    %v454 = vand.u32 %v45, 4294901760
    %v455 = vsub.f32 %v45, %v454
    %456 = vmatpush1.msra.mxu0 %v455
    %457 = vmatprep.subr.mxu0 0.0
    %v458 = vand.u32 %v46, 4294901760
    %v459 = vsub.f32 %v46, %v458
    %460 = vmatpush1.msra.mxu0 %v459
    %461 = vmatprep.subr.mxu0 0.0
    %v462 = vand.u32 %v47, 4294901760
    %v463 = vsub.f32 %v47, %v462
    %464 = vmatpush1.msra.mxu0 %v463
    %465 = vmatprep.subr.mxu0 0.0
    %v466 = vand.u32 %v48, 4294901760
    %v467 = vsub.f32 %v48, %v466
    %468 = vmatpush1.msra.mxu0 %v467
    %469 = vmatprep.subr.mxu0 0.0
    %v470 = vand.u32 %v49, 4294901760
    %v471 = vsub.f32 %v49, %v470
    %472 = vmatpush1.msra.mxu0 %v471
    %473 = vmatprep.subr.mxu0 0.0
    %v474 = vand.u32 %v50, 4294901760
    %v475 = vsub.f32 %v50, %v474
    %476 = vmatpush1.msra.mxu0 %v475
    %477 = vmatprep.subr.mxu0 0.0
    %v478 = vand.u32 %v51, 4294901760
    %v479 = vsub.f32 %v51, %v478
    %480 = vmatpush1.msra.mxu0 %v479
    %481 = vmatprep.subr.mxu0 0.0
    %v482 = vand.u32 %v52, 4294901760
    %v483 = vsub.f32 %v52, %v482
    %484 = vmatpush1.msra.mxu0 %v483
    %485 = vmatprep.subr.mxu0 0.0
    %v486 = vand.u32 %v53, 4294901760
    %v487 = vsub.f32 %v53, %v486
    %488 = vmatpush1.msra.mxu0 %v487
    %489 = vmatprep.subr.mxu0 0.0
    %v490 = vand.u32 %v54, 4294901760
    %v491 = vsub.f32 %v54, %v490
    %492 = vmatpush1.msra.mxu0 %v491
    %493 = vmatprep.subr.mxu0 0.0
    %v494 = vand.u32 %v55, 4294901760
    %v495 = vsub.f32 %v55, %v494
    %496 = vmatpush1.msra.mxu0 %v495
    %497 = vmatprep.subr.mxu0 0.0
    %v498 = vand.u32 %v56, 4294901760
    %v499 = vsub.f32 %v56, %v498
    %500 = vmatpush1.msra.mxu0 %v499
    %501 = vmatprep.subr.mxu0 0.0
    %v502 = vand.u32 %v57, 4294901760
    %v503 = vsub.f32 %v57, %v502
    %504 = vmatpush1.msra.mxu0 %v503
    %505 = vmatprep.subr.mxu0 0.0
    %v506 = vand.u32 %v58, 4294901760
    %v507 = vsub.f32 %v58, %v506
    %508 = vmatpush1.msra.mxu0 %v507
    %509 = vmatprep.subr.mxu0 0.0
    %v510 = vand.u32 %v59, 4294901760
    %v511 = vsub.f32 %v59, %v510
    %512 = vmatpush1.msra.mxu0 %v511
    %513 = vmatprep.subr.mxu0 0.0
    %v514 = vand.u32 %v60, 4294901760
    %v515 = vsub.f32 %v60, %v514
    %516 = vmatpush1.msra.mxu0 %v515
    %517 = vmatprep.subr.mxu0 0.0
    %v518 = vand.u32 %v61, 4294901760
    %v519 = vsub.f32 %v61, %v518
    %520 = vmatpush1.msra.mxu0 %v519
    %521 = vmatprep.subr.mxu0 0.0
    %v522 = vand.u32 %v62, 4294901760
    %v523 = vsub.f32 %v62, %v522
    %524 = vmatpush1.msra.mxu0 %v523
    %525 = vmatprep.subr.mxu0 0.0
    %v526 = vand.u32 %v63, 4294901760
    %v527 = vsub.f32 %v63, %v526
    %528 = vmatpush1.msra.mxu0 %v527
    %529 = vmatprep.subr.mxu0 0.0
    %v530 = vand.u32 %v64, 4294901760
    %v531 = vsub.f32 %v64, %v530
    %532 = vmatpush1.msra.mxu0 %v531
    %533 = vmatprep.subr.mxu0 0.0
    %v534 = vand.u32 %v65, 4294901760
    %v535 = vsub.f32 %v65, %v534
    %536 = vmatpush1.msra.mxu0 %v535
    %537 = vmatprep.subr.mxu0 0.0
    %v538 = vand.u32 %v66, 4294901760
    %v539 = vsub.f32 %v66, %v538
    %540 = vmatpush1.msra.mxu0 %v539
    %541 = vmatprep.subr.mxu0 0.0
    %v542 = vand.u32 %v67, 4294901760
    %v543 = vsub.f32 %v67, %v542
    %544 = vmatpush1.msra.mxu0 %v543
    %545 = vmatprep.subr.mxu0 0.0
    %v546 = vand.u32 %v68, 4294901760
    %v547 = vsub.f32 %v68, %v546
    %548 = vmatpush1.msra.mxu0 %v547
    %549 = vmatprep.subr.mxu0 0.0
    %v550 = vand.u32 %v69, 4294901760
    %v551 = vsub.f32 %v69, %v550
    %552 = vmatpush1.msra.mxu0 %v551
    %553 = vmatprep.subr.mxu0 0.0
    %v554 = vand.u32 %v70, 4294901760
    %v555 = vsub.f32 %v70, %v554
    %556 = vmatpush1.msra.mxu0 %v555
    %557 = vmatprep.subr.mxu0 0.0
    %v558 = vand.u32 %v71, 4294901760
    %v559 = vsub.f32 %v71, %v558
    %560 = vmatpush1.msra.mxu0 %v559
    %561 = vmatprep.subr.mxu0 0.0
    %v562 = vand.u32 %v72, 4294901760
    %v563 = vsub.f32 %v72, %v562
    %564 = vmatpush1.msra.mxu0 %v563
    %565 = vmatprep.subr.mxu0 0.0
    %v566 = vand.u32 %v73, 4294901760
    %v567 = vsub.f32 %v73, %v566
    %568 = vmatpush1.msra.mxu0 %v567
    %569 = vmatprep.subr.mxu0 0.0
    %v570 = vand.u32 %v74, 4294901760
    %v571 = vsub.f32 %v74, %v570
    %572 = vmatpush1.msra.mxu0 %v571
    %573 = vmatprep.subr.mxu0 0.0
    %v574 = vand.u32 %v75, 4294901760
    %v575 = vsub.f32 %v75, %v574
    %576 = vmatpush1.msra.mxu0 %v575
    %577 = vmatprep.subr.mxu0 0.0
    %v578 = vand.u32 %v76, 4294901760
    %v579 = vsub.f32 %v76, %v578
    %580 = vmatpush1.msra.mxu0 %v579
    %v581 = vand.u32 %v101, 4294901760
    %v582 = vsub.f32 %v101, %v581
    %583 = vmatprep.mubr.f32.mxu0 %v582
    %v584 = vand.u32 %v97, 4294901760
    %v585 = vsub.f32 %v97, %v584
    %586 = vmatmul.mubr.f32.gmra.mrb[0].mxu0 %v585
    %v587 = vpop.f32.mrb[0].mxu0
    %v588 = vadd.f32 %v450, %v587
    %v589 = vpop.f32.mrb[0].mxu0
    %590 = vdwg.mxu0
    %591 = vmatprep.subr.mxu0 0.0
    %v592 = vand.u32 %v45, 4294901760
    %593 = vmatpush1.msra.mxu0 %v592
    %594 = vmatprep.subr.mxu0 0.0
    %v595 = vand.u32 %v46, 4294901760
    %596 = vmatpush1.msra.mxu0 %v595
    %597 = vmatprep.subr.mxu0 0.0
    %v598 = vand.u32 %v47, 4294901760
    %599 = vmatpush1.msra.mxu0 %v598
    %600 = vmatprep.subr.mxu0 0.0
    %v601 = vand.u32 %v48, 4294901760
    %602 = vmatpush1.msra.mxu0 %v601
    %603 = vmatprep.subr.mxu0 0.0
    %v604 = vand.u32 %v49, 4294901760
    %605 = vmatpush1.msra.mxu0 %v604
    %606 = vmatprep.subr.mxu0 0.0
    %v607 = vand.u32 %v50, 4294901760
    %608 = vmatpush1.msra.mxu0 %v607
    %609 = vmatprep.subr.mxu0 0.0
    %v610 = vand.u32 %v51, 4294901760
    %611 = vmatpush1.msra.mxu0 %v610
    %612 = vmatprep.subr.mxu0 0.0
    %v613 = vand.u32 %v52, 4294901760
    %614 = vmatpush1.msra.mxu0 %v613
    %615 = vmatprep.subr.mxu0 0.0
    %v616 = vand.u32 %v53, 4294901760
    %617 = vmatpush1.msra.mxu0 %v616
    %618 = vmatprep.subr.mxu0 0.0
    %v619 = vand.u32 %v54, 4294901760
    %620 = vmatpush1.msra.mxu0 %v619
    %621 = vmatprep.subr.mxu0 0.0
    %v622 = vand.u32 %v55, 4294901760
    %623 = vmatpush1.msra.mxu0 %v622
    %624 = vmatprep.subr.mxu0 0.0
    %v625 = vand.u32 %v56, 4294901760
    %626 = vmatpush1.msra.mxu0 %v625
    %627 = vmatprep.subr.mxu0 0.0
    %v628 = vand.u32 %v57, 4294901760
    %629 = vmatpush1.msra.mxu0 %v628
    %630 = vmatprep.subr.mxu0 0.0
    %v631 = vand.u32 %v58, 4294901760
    %632 = vmatpush1.msra.mxu0 %v631
    %633 = vmatprep.subr.mxu0 0.0
    %v634 = vand.u32 %v59, 4294901760
    %635 = vmatpush1.msra.mxu0 %v634
    %636 = vmatprep.subr.mxu0 0.0
    %v637 = vand.u32 %v60, 4294901760
    %638 = vmatpush1.msra.mxu0 %v637
    %639 = vmatprep.subr.mxu0 0.0
    %v640 = vand.u32 %v61, 4294901760
    %641 = vmatpush1.msra.mxu0 %v640
    %642 = vmatprep.subr.mxu0 0.0
    %v643 = vand.u32 %v62, 4294901760
    %644 = vmatpush1.msra.mxu0 %v643
    %645 = vmatprep.subr.mxu0 0.0
    %v646 = vand.u32 %v63, 4294901760
    %647 = vmatpush1.msra.mxu0 %v646
    %648 = vmatprep.subr.mxu0 0.0
    %v649 = vand.u32 %v64, 4294901760
    %650 = vmatpush1.msra.mxu0 %v649
    %651 = vmatprep.subr.mxu0 0.0
    %v652 = vand.u32 %v65, 4294901760
    %653 = vmatpush1.msra.mxu0 %v652
    %654 = vmatprep.subr.mxu0 0.0
    %v655 = vand.u32 %v66, 4294901760
    %656 = vmatpush1.msra.mxu0 %v655
    %657 = vmatprep.subr.mxu0 0.0
    %v658 = vand.u32 %v67, 4294901760
    %659 = vmatpush1.msra.mxu0 %v658
    %660 = vmatprep.subr.mxu0 0.0
    %v661 = vand.u32 %v68, 4294901760
    %662 = vmatpush1.msra.mxu0 %v661
    %663 = vmatprep.subr.mxu0 0.0
    %v664 = vand.u32 %v69, 4294901760
    %665 = vmatpush1.msra.mxu0 %v664
    %666 = vmatprep.subr.mxu0 0.0
    %v667 = vand.u32 %v70, 4294901760
    %668 = vmatpush1.msra.mxu0 %v667
    %669 = vmatprep.subr.mxu0 0.0
    %v670 = vand.u32 %v71, 4294901760
    %671 = vmatpush1.msra.mxu0 %v670
    %672 = vmatprep.subr.mxu0 0.0
    %v673 = vand.u32 %v72, 4294901760
    %674 = vmatpush1.msra.mxu0 %v673
    %675 = vmatprep.subr.mxu0 0.0
    %v676 = vand.u32 %v73, 4294901760
    %677 = vmatpush1.msra.mxu0 %v676
    %678 = vmatprep.subr.mxu0 0.0
    %v679 = vand.u32 %v74, 4294901760
    %680 = vmatpush1.msra.mxu0 %v679
    %681 = vmatprep.subr.mxu0 0.0
    %v682 = vand.u32 %v75, 4294901760
    %683 = vmatpush1.msra.mxu0 %v682
    %684 = vmatprep.subr.mxu0 0.0
    %v685 = vand.u32 %v76, 4294901760
    %686 = vmatpush1.msra.mxu0 %v685
    %v687 = vand.u32 %v101, 4294901760
    %v688 = vsub.f32 %v101, %v687
    %v689 = vand.u32 %v688, 4294901760
    %690 = vmatprep.mubr.f32.mxu0 %v689
    %v691 = vand.u32 %v97, 4294901760
    %v692 = vsub.f32 %v97, %v691
    %v693 = vand.u32 %v692, 4294901760
    %694 = vmatmul.mubr.f32.gmra.mrb[0].mxu0 %v693
    %v695 = vpop.f32.mrb[0].mxu0
    %v696 = vadd.f32 %v588, %v695
    %v697 = vpop.f32.mrb[0].mxu0
    %698 = vdwg.mxu0
    %699 = vmatprep.subr.mxu0 0.0
    %v700 = vand.u32 %v45, 4294901760
    %v701 = vsub.f32 %v45, %v700
    %v702 = vand.u32 %v701, 4294901760
    %703 = vmatpush1.msra.mxu0 %v702
    %704 = vmatprep.subr.mxu0 0.0
    %v705 = vand.u32 %v46, 4294901760
    %v706 = vsub.f32 %v46, %v705
    %v707 = vand.u32 %v706, 4294901760
    %708 = vmatpush1.msra.mxu0 %v707
    %709 = vmatprep.subr.mxu0 0.0
    %v710 = vand.u32 %v47, 4294901760
    %v711 = vsub.f32 %v47, %v710
    %v712 = vand.u32 %v711, 4294901760
    %713 = vmatpush1.msra.mxu0 %v712
    %714 = vmatprep.subr.mxu0 0.0
    %v715 = vand.u32 %v48, 4294901760
    %v716 = vsub.f32 %v48, %v715
    %v717 = vand.u32 %v716, 4294901760
    %718 = vmatpush1.msra.mxu0 %v717
    %719 = vmatprep.subr.mxu0 0.0
    %v720 = vand.u32 %v49, 4294901760
    %v721 = vsub.f32 %v49, %v720
    %v722 = vand.u32 %v721, 4294901760
    %723 = vmatpush1.msra.mxu0 %v722
    %724 = vmatprep.subr.mxu0 0.0
    %v725 = vand.u32 %v50, 4294901760
    %v726 = vsub.f32 %v50, %v725
    %v727 = vand.u32 %v726, 4294901760
    %728 = vmatpush1.msra.mxu0 %v727
    %729 = vmatprep.subr.mxu0 0.0
    %v730 = vand.u32 %v51, 4294901760
    %v731 = vsub.f32 %v51, %v730
    %v732 = vand.u32 %v731, 4294901760
    %733 = vmatpush1.msra.mxu0 %v732
    %734 = vmatprep.subr.mxu0 0.0
    %v735 = vand.u32 %v52, 4294901760
    %v736 = vsub.f32 %v52, %v735
    %v737 = vand.u32 %v736, 4294901760
    %738 = vmatpush1.msra.mxu0 %v737
    %739 = vmatprep.subr.mxu0 0.0
    %v740 = vand.u32 %v53, 4294901760
    %v741 = vsub.f32 %v53, %v740
    %v742 = vand.u32 %v741, 4294901760
    %743 = vmatpush1.msra.mxu0 %v742
    %744 = vmatprep.subr.mxu0 0.0
    %v745 = vand.u32 %v54, 4294901760
    %v746 = vsub.f32 %v54, %v745
    %v747 = vand.u32 %v746, 4294901760
    %748 = vmatpush1.msra.mxu0 %v747
    %749 = vmatprep.subr.mxu0 0.0
    %v750 = vand.u32 %v55, 4294901760
    %v751 = vsub.f32 %v55, %v750
    %v752 = vand.u32 %v751, 4294901760
    %753 = vmatpush1.msra.mxu0 %v752
    %754 = vmatprep.subr.mxu0 0.0
    %v755 = vand.u32 %v56, 4294901760
    %v756 = vsub.f32 %v56, %v755
    %v757 = vand.u32 %v756, 4294901760
    %758 = vmatpush1.msra.mxu0 %v757
    %759 = vmatprep.subr.mxu0 0.0
    %v760 = vand.u32 %v57, 4294901760
    %v761 = vsub.f32 %v57, %v760
    %v762 = vand.u32 %v761, 4294901760
    %763 = vmatpush1.msra.mxu0 %v762
    %764 = vmatprep.subr.mxu0 0.0
    %v765 = vand.u32 %v58, 4294901760
    %v766 = vsub.f32 %v58, %v765
    %v767 = vand.u32 %v766, 4294901760
    %768 = vmatpush1.msra.mxu0 %v767
    %769 = vmatprep.subr.mxu0 0.0
    %v770 = vand.u32 %v59, 4294901760
    %v771 = vsub.f32 %v59, %v770
    %v772 = vand.u32 %v771, 4294901760
    %773 = vmatpush1.msra.mxu0 %v772
    %774 = vmatprep.subr.mxu0 0.0
    %v775 = vand.u32 %v60, 4294901760
    %v776 = vsub.f32 %v60, %v775
    %v777 = vand.u32 %v776, 4294901760
    %778 = vmatpush1.msra.mxu0 %v777
    %779 = vmatprep.subr.mxu0 0.0
    %v780 = vand.u32 %v61, 4294901760
    %v781 = vsub.f32 %v61, %v780
    %v782 = vand.u32 %v781, 4294901760
    %783 = vmatpush1.msra.mxu0 %v782
    %784 = vmatprep.subr.mxu0 0.0
    %v785 = vand.u32 %v62, 4294901760
    %v786 = vsub.f32 %v62, %v785
    %v787 = vand.u32 %v786, 4294901760
    %788 = vmatpush1.msra.mxu0 %v787
    %789 = vmatprep.subr.mxu0 0.0
    %v790 = vand.u32 %v63, 4294901760
    %v791 = vsub.f32 %v63, %v790
    %v792 = vand.u32 %v791, 4294901760
    %793 = vmatpush1.msra.mxu0 %v792
    %794 = vmatprep.subr.mxu0 0.0
    %v795 = vand.u32 %v64, 4294901760
    %v796 = vsub.f32 %v64, %v795
    %v797 = vand.u32 %v796, 4294901760
    %798 = vmatpush1.msra.mxu0 %v797
    %799 = vmatprep.subr.mxu0 0.0
    %v800 = vand.u32 %v65, 4294901760
    %v801 = vsub.f32 %v65, %v800
    %v802 = vand.u32 %v801, 4294901760
    %803 = vmatpush1.msra.mxu0 %v802
    %804 = vmatprep.subr.mxu0 0.0
    %v805 = vand.u32 %v66, 4294901760
    %v806 = vsub.f32 %v66, %v805
    %v807 = vand.u32 %v806, 4294901760
    %808 = vmatpush1.msra.mxu0 %v807
    %809 = vmatprep.subr.mxu0 0.0
    %v810 = vand.u32 %v67, 4294901760
    %v811 = vsub.f32 %v67, %v810
    %v812 = vand.u32 %v811, 4294901760
    %813 = vmatpush1.msra.mxu0 %v812
    %814 = vmatprep.subr.mxu0 0.0
    %v815 = vand.u32 %v68, 4294901760
    %v816 = vsub.f32 %v68, %v815
    %v817 = vand.u32 %v816, 4294901760
    %818 = vmatpush1.msra.mxu0 %v817
    %819 = vmatprep.subr.mxu0 0.0
    %v820 = vand.u32 %v69, 4294901760
    %v821 = vsub.f32 %v69, %v820
    %v822 = vand.u32 %v821, 4294901760
    %823 = vmatpush1.msra.mxu0 %v822
    %824 = vmatprep.subr.mxu0 0.0
    %v825 = vand.u32 %v70, 4294901760
    %v826 = vsub.f32 %v70, %v825
    %v827 = vand.u32 %v826, 4294901760
    %828 = vmatpush1.msra.mxu0 %v827
    %829 = vmatprep.subr.mxu0 0.0
    %v830 = vand.u32 %v71, 4294901760
    %v831 = vsub.f32 %v71, %v830
    %v832 = vand.u32 %v831, 4294901760
    %833 = vmatpush1.msra.mxu0 %v832
    %834 = vmatprep.subr.mxu0 0.0
    %v835 = vand.u32 %v72, 4294901760
    %v836 = vsub.f32 %v72, %v835
    %v837 = vand.u32 %v836, 4294901760
    %838 = vmatpush1.msra.mxu0 %v837
    %839 = vmatprep.subr.mxu0 0.0
    %v840 = vand.u32 %v73, 4294901760
    %v841 = vsub.f32 %v73, %v840
    %v842 = vand.u32 %v841, 4294901760
    %843 = vmatpush1.msra.mxu0 %v842
    %844 = vmatprep.subr.mxu0 0.0
    %v845 = vand.u32 %v74, 4294901760
    %v846 = vsub.f32 %v74, %v845
    %v847 = vand.u32 %v846, 4294901760
    %848 = vmatpush1.msra.mxu0 %v847
    %849 = vmatprep.subr.mxu0 0.0
    %v850 = vand.u32 %v75, 4294901760
    %v851 = vsub.f32 %v75, %v850
    %v852 = vand.u32 %v851, 4294901760
    %853 = vmatpush1.msra.mxu0 %v852
    %854 = vmatprep.subr.mxu0 0.0
    %v855 = vand.u32 %v76, 4294901760
    %v856 = vsub.f32 %v76, %v855
    %v857 = vand.u32 %v856, 4294901760
    %858 = vmatpush1.msra.mxu0 %v857
    %v859 = vand.u32 %v101, 4294901760
    %860 = vmatprep.mubr.f32.mxu0 %v859
    %v861 = vand.u32 %v97, 4294901760
    %862 = vmatmul.mubr.f32.gmra.mrb[0].mxu0 %v861
    %v863 = vpop.f32.mrb[0].mxu0
    %v864 = vadd.f32 %v696, %v863
    %v865 = vpop.f32.mrb[0].mxu0
    %866 = vdwg.mxu0
    %867 = vmatprep.subr.mxu0 0.0
    %v868 = vand.u32 %v45, 4294901760
    %869 = vmatpush1.msra.mxu0 %v868
    %870 = vmatprep.subr.mxu0 0.0
    %v871 = vand.u32 %v46, 4294901760
    %872 = vmatpush1.msra.mxu0 %v871
    %873 = vmatprep.subr.mxu0 0.0
    %v874 = vand.u32 %v47, 4294901760
    %875 = vmatpush1.msra.mxu0 %v874
    %876 = vmatprep.subr.mxu0 0.0
    %v877 = vand.u32 %v48, 4294901760
    %878 = vmatpush1.msra.mxu0 %v877
    %879 = vmatprep.subr.mxu0 0.0
    %v880 = vand.u32 %v49, 4294901760
    %881 = vmatpush1.msra.mxu0 %v880
    %882 = vmatprep.subr.mxu0 0.0
    %v883 = vand.u32 %v50, 4294901760
    %884 = vmatpush1.msra.mxu0 %v883
    %885 = vmatprep.subr.mxu0 0.0
    %v886 = vand.u32 %v51, 4294901760
    %887 = vmatpush1.msra.mxu0 %v886
    %888 = vmatprep.subr.mxu0 0.0
    %v889 = vand.u32 %v52, 4294901760
    %890 = vmatpush1.msra.mxu0 %v889
    %891 = vmatprep.subr.mxu0 0.0
    %v892 = vand.u32 %v53, 4294901760
    %893 = vmatpush1.msra.mxu0 %v892
    %894 = vmatprep.subr.mxu0 0.0
    %v895 = vand.u32 %v54, 4294901760
    %896 = vmatpush1.msra.mxu0 %v895
    %897 = vmatprep.subr.mxu0 0.0
    %v898 = vand.u32 %v55, 4294901760
    %899 = vmatpush1.msra.mxu0 %v898
    %900 = vmatprep.subr.mxu0 0.0
    %v901 = vand.u32 %v56, 4294901760
    %902 = vmatpush1.msra.mxu0 %v901
    %903 = vmatprep.subr.mxu0 0.0
    %v904 = vand.u32 %v57, 4294901760
    %905 = vmatpush1.msra.mxu0 %v904
    %906 = vmatprep.subr.mxu0 0.0
    %v907 = vand.u32 %v58, 4294901760
    %908 = vmatpush1.msra.mxu0 %v907
    %909 = vmatprep.subr.mxu0 0.0
    %v910 = vand.u32 %v59, 4294901760
    %911 = vmatpush1.msra.mxu0 %v910
    %912 = vmatprep.subr.mxu0 0.0
    %v913 = vand.u32 %v60, 4294901760
    %914 = vmatpush1.msra.mxu0 %v913
    %915 = vmatprep.subr.mxu0 0.0
    %v916 = vand.u32 %v61, 4294901760
    %917 = vmatpush1.msra.mxu0 %v916
    %918 = vmatprep.subr.mxu0 0.0
    %v919 = vand.u32 %v62, 4294901760
    %920 = vmatpush1.msra.mxu0 %v919
    %921 = vmatprep.subr.mxu0 0.0
    %v922 = vand.u32 %v63, 4294901760
    %923 = vmatpush1.msra.mxu0 %v922
    %924 = vmatprep.subr.mxu0 0.0
    %v925 = vand.u32 %v64, 4294901760
    %926 = vmatpush1.msra.mxu0 %v925
    %927 = vmatprep.subr.mxu0 0.0
    %v928 = vand.u32 %v65, 4294901760
    %929 = vmatpush1.msra.mxu0 %v928
    %930 = vmatprep.subr.mxu0 0.0
    %v931 = vand.u32 %v66, 4294901760
    %932 = vmatpush1.msra.mxu0 %v931
    %933 = vmatprep.subr.mxu0 0.0
    %v934 = vand.u32 %v67, 4294901760
    %935 = vmatpush1.msra.mxu0 %v934
    %936 = vmatprep.subr.mxu0 0.0
    %v937 = vand.u32 %v68, 4294901760
    %938 = vmatpush1.msra.mxu0 %v937
    %939 = vmatprep.subr.mxu0 0.0
    %v940 = vand.u32 %v69, 4294901760
    %941 = vmatpush1.msra.mxu0 %v940
    %942 = vmatprep.subr.mxu0 0.0
    %v943 = vand.u32 %v70, 4294901760
    %944 = vmatpush1.msra.mxu0 %v943
    %945 = vmatprep.subr.mxu0 0.0
    %v946 = vand.u32 %v71, 4294901760
    %947 = vmatpush1.msra.mxu0 %v946
    %948 = vmatprep.subr.mxu0 0.0
    %v949 = vand.u32 %v72, 4294901760
    %950 = vmatpush1.msra.mxu0 %v949
    %951 = vmatprep.subr.mxu0 0.0
    %v952 = vand.u32 %v73, 4294901760
    %953 = vmatpush1.msra.mxu0 %v952
    %954 = vmatprep.subr.mxu0 0.0
    %v955 = vand.u32 %v74, 4294901760
    %956 = vmatpush1.msra.mxu0 %v955
    %957 = vmatprep.subr.mxu0 0.0
    %v958 = vand.u32 %v75, 4294901760
    %959 = vmatpush1.msra.mxu0 %v958
    %960 = vmatprep.subr.mxu0 0.0
    %v961 = vand.u32 %v76, 4294901760
    %962 = vmatpush1.msra.mxu0 %v961
    %v963 = vand.u32 %v101, 4294901760
    %964 = vmatprep.mubr.f32.mxu0 %v963
    %v965 = vand.u32 %v97, 4294901760
    %966 = vmatmul.mubr.f32.gmra.mrb[0].mxu0 %v965
    %v967 = vpop.f32.mrb[0].mxu0
    %v968 = vadd.f32 %v864, %v967
    %v969 = vpop.f32.mrb[0].mxu0
    %970 = vdwg.mxu0
    %971 = vmatprep.subr.mxu0 0.0
    %v972 = vand.u32 %v77, 4294901760
    %973 = vmatpush1.msra.mxu0 %v972
    %974 = vmatprep.subr.mxu0 0.0
    %v975 = vand.u32 %v78, 4294901760
    %976 = vmatpush1.msra.mxu0 %v975
    %977 = vmatprep.subr.mxu0 0.0
    %v978 = vand.u32 %v79, 4294901760
    %979 = vmatpush1.msra.mxu0 %v978
    %980 = vmatprep.subr.mxu0 0.0
    %v981 = vand.u32 %v80, 4294901760
    %982 = vmatpush1.msra.mxu0 %v981
    %983 = vmatprep.subr.mxu0 0.0
    %v984 = vand.u32 %v81, 4294901760
    %985 = vmatpush1.msra.mxu0 %v984
    %986 = vmatprep.subr.mxu0 0.0
    %v987 = vand.u32 %v82, 4294901760
    %988 = vmatpush1.msra.mxu0 %v987
    %989 = vmatprep.subr.mxu0 0.0
    %v990 = vand.u32 %v83, 4294901760
    %991 = vmatpush1.msra.mxu0 %v990
    %992 = vmatprep.subr.mxu0 0.0
    %v993 = vand.u32 %v84, 4294901760
    %994 = vmatpush1.msra.mxu0 %v993
    %995 = vmatprep.subr.mxu0 0.0
    %v996 = vand.u32 %v85, 4294901760
    %997 = vmatpush1.msra.mxu0 %v996
    %998 = vmatprep.subr.mxu0 0.0
    %v999 = vand.u32 %v86, 4294901760
    %1000 = vmatpush1.msra.mxu0 %v999
    %1001 = vmatprep.subr.mxu0 0.0
    %v1002 = vand.u32 %v87, 4294901760
    %1003 = vmatpush1.msra.mxu0 %v1002
    %1004 = vmatprep.subr.mxu0 0.0
    %v1005 = vand.u32 %v88, 4294901760
    %1006 = vmatpush1.msra.mxu0 %v1005
    %1007 = vmatprep.subr.mxu0 0.0
    %v1008 = vand.u32 %v89, 4294901760
    %1009 = vmatpush1.msra.mxu0 %v1008
    %1010 = vmatprep.subr.mxu0 0.0
    %v1011 = vand.u32 %v90, 4294901760
    %1012 = vmatpush1.msra.mxu0 %v1011
    %1013 = vmatprep.subr.mxu0 0.0
    %v1014 = vand.u32 %v91, 4294901760
    %1015 = vmatpush1.msra.mxu0 %v1014
    %1016 = vmatprep.subr.mxu0 0.0
    %v1017 = vand.u32 %v92, 4294901760
    %1018 = vmatpush1.msra.mxu0 %v1017
    %1019 = vmatprep.subr.mxu0 0.0
    %1020 = vmatpush1.msra.mxu0 0.0
    %1021 = vmatprep.subr.mxu0 0.0
    %1022 = vmatpush1.msra.mxu0 0.0
    %1023 = vmatprep.subr.mxu0 0.0
    %1024 = vmatpush1.msra.mxu0 0.0
    %1025 = vmatprep.subr.mxu0 0.0
    %1026 = vmatpush1.msra.mxu0 0.0
    %1027 = vmatprep.subr.mxu0 0.0
    %1028 = vmatpush1.msra.mxu0 0.0
    %1029 = vmatprep.subr.mxu0 0.0
    %1030 = vmatpush1.msra.mxu0 0.0
    %1031 = vmatprep.subr.mxu0 0.0
    %1032 = vmatpush1.msra.mxu0 0.0
    %1033 = vmatprep.subr.mxu0 0.0
    %1034 = vmatpush1.msra.mxu0 0.0
    %1035 = vmatprep.subr.mxu0 0.0
    %1036 = vmatpush1.msra.mxu0 0.0
    %1037 = vmatprep.subr.mxu0 0.0
    %1038 = vmatpush1.msra.mxu0 0.0
    %1039 = vmatprep.subr.mxu0 0.0
    %1040 = vmatpush1.msra.mxu0 0.0
    %1041 = vmatprep.subr.mxu0 0.0
    %1042 = vmatpush1.msra.mxu0 0.0
    %1043 = vmatprep.subr.mxu0 0.0
    %1044 = vmatpush1.msra.mxu0 0.0
    %1045 = vmatprep.subr.mxu0 0.0
    %1046 = vmatpush1.msra.mxu0 0.0
    %1047 = vmatprep.subr.mxu0 0.0
    %1048 = vmatpush1.msra.mxu0 0.0
    %1049 = vmatprep.subr.mxu0 0.0
    %1050 = vmatpush1.msra.mxu0 0.0
    %1051 = vmatprep.mubr.f32.mxu0 0.0
    %v1052 = vand.u32 %v105, 4294901760
    %v1053 = vsub.f32 %v105, %v1052
    %v1054 = vand.u32 %v1053, 4294901760
    %v1055 = vsub.f32 %v1053, %v1054
    %v1056 = vand.u32 %v1055, 4294901760
    %1057 = vmatmul.mubr.f32.gmra.mrb[0].mxu0 %v1056
    %v1058 = vpop.f32.mrb[0].mxu0
    %v1059 = vadd.f32 %v968, %v1058
    %v1060 = vpop.f32.mrb[0].mxu0
    %1061 = vdwg.mxu0
    %1062 = vmatprep.subr.mxu0 0.0
    %v1063 = vand.u32 %v77, 4294901760
    %v1064 = vsub.f32 %v77, %v1063
    %v1065 = vand.u32 %v1064, 4294901760
    %v1066 = vsub.f32 %v1064, %v1065
    %v1067 = vand.u32 %v1066, 4294901760
    %1068 = vmatpush1.msra.mxu0 %v1067
    %1069 = vmatprep.subr.mxu0 0.0
    %v1070 = vand.u32 %v78, 4294901760
    %v1071 = vsub.f32 %v78, %v1070
    %v1072 = vand.u32 %v1071, 4294901760
    %v1073 = vsub.f32 %v1071, %v1072
    %v1074 = vand.u32 %v1073, 4294901760
    %1075 = vmatpush1.msra.mxu0 %v1074
    %1076 = vmatprep.subr.mxu0 0.0
    %v1077 = vand.u32 %v79, 4294901760
    %v1078 = vsub.f32 %v79, %v1077
    %v1079 = vand.u32 %v1078, 4294901760
    %v1080 = vsub.f32 %v1078, %v1079
    %v1081 = vand.u32 %v1080, 4294901760
    %1082 = vmatpush1.msra.mxu0 %v1081
    %1083 = vmatprep.subr.mxu0 0.0
    %v1084 = vand.u32 %v80, 4294901760
    %v1085 = vsub.f32 %v80, %v1084
    %v1086 = vand.u32 %v1085, 4294901760
    %v1087 = vsub.f32 %v1085, %v1086
    %v1088 = vand.u32 %v1087, 4294901760
    %1089 = vmatpush1.msra.mxu0 %v1088
    %1090 = vmatprep.subr.mxu0 0.0
    %v1091 = vand.u32 %v81, 4294901760
    %v1092 = vsub.f32 %v81, %v1091
    %v1093 = vand.u32 %v1092, 4294901760
    %v1094 = vsub.f32 %v1092, %v1093
    %v1095 = vand.u32 %v1094, 4294901760
    %1096 = vmatpush1.msra.mxu0 %v1095
    %1097 = vmatprep.subr.mxu0 0.0
    %v1098 = vand.u32 %v82, 4294901760
    %v1099 = vsub.f32 %v82, %v1098
    %v1100 = vand.u32 %v1099, 4294901760
    %v1101 = vsub.f32 %v1099, %v1100
    %v1102 = vand.u32 %v1101, 4294901760
    %1103 = vmatpush1.msra.mxu0 %v1102
    %1104 = vmatprep.subr.mxu0 0.0
    %v1105 = vand.u32 %v83, 4294901760
    %v1106 = vsub.f32 %v83, %v1105
    %v1107 = vand.u32 %v1106, 4294901760
    %v1108 = vsub.f32 %v1106, %v1107
    %v1109 = vand.u32 %v1108, 4294901760
    %1110 = vmatpush1.msra.mxu0 %v1109
    %1111 = vmatprep.subr.mxu0 0.0
    %v1112 = vand.u32 %v84, 4294901760
    %v1113 = vsub.f32 %v84, %v1112
    %v1114 = vand.u32 %v1113, 4294901760
    %v1115 = vsub.f32 %v1113, %v1114
    %v1116 = vand.u32 %v1115, 4294901760
    %1117 = vmatpush1.msra.mxu0 %v1116
    %1118 = vmatprep.subr.mxu0 0.0
    %v1119 = vand.u32 %v85, 4294901760
    %v1120 = vsub.f32 %v85, %v1119
    %v1121 = vand.u32 %v1120, 4294901760
    %v1122 = vsub.f32 %v1120, %v1121
    %v1123 = vand.u32 %v1122, 4294901760
    %1124 = vmatpush1.msra.mxu0 %v1123
    %1125 = vmatprep.subr.mxu0 0.0
    %v1126 = vand.u32 %v86, 4294901760
    %v1127 = vsub.f32 %v86, %v1126
    %v1128 = vand.u32 %v1127, 4294901760
    %v1129 = vsub.f32 %v1127, %v1128
    %v1130 = vand.u32 %v1129, 4294901760
    %1131 = vmatpush1.msra.mxu0 %v1130
    %1132 = vmatprep.subr.mxu0 0.0
    %v1133 = vand.u32 %v87, 4294901760
    %v1134 = vsub.f32 %v87, %v1133
    %v1135 = vand.u32 %v1134, 4294901760
    %v1136 = vsub.f32 %v1134, %v1135
    %v1137 = vand.u32 %v1136, 4294901760
    %1138 = vmatpush1.msra.mxu0 %v1137
    %1139 = vmatprep.subr.mxu0 0.0
    %v1140 = vand.u32 %v88, 4294901760
    %v1141 = vsub.f32 %v88, %v1140
    %v1142 = vand.u32 %v1141, 4294901760
    %v1143 = vsub.f32 %v1141, %v1142
    %v1144 = vand.u32 %v1143, 4294901760
    %1145 = vmatpush1.msra.mxu0 %v1144
    %1146 = vmatprep.subr.mxu0 0.0
    %v1147 = vand.u32 %v89, 4294901760
    %v1148 = vsub.f32 %v89, %v1147
    %v1149 = vand.u32 %v1148, 4294901760
    %v1150 = vsub.f32 %v1148, %v1149
    %v1151 = vand.u32 %v1150, 4294901760
    %1152 = vmatpush1.msra.mxu0 %v1151
    %1153 = vmatprep.subr.mxu0 0.0
    %v1154 = vand.u32 %v90, 4294901760
    %v1155 = vsub.f32 %v90, %v1154
    %v1156 = vand.u32 %v1155, 4294901760
    %v1157 = vsub.f32 %v1155, %v1156
    %v1158 = vand.u32 %v1157, 4294901760
    %1159 = vmatpush1.msra.mxu0 %v1158
    %1160 = vmatprep.subr.mxu0 0.0
    %v1161 = vand.u32 %v91, 4294901760
    %v1162 = vsub.f32 %v91, %v1161
    %v1163 = vand.u32 %v1162, 4294901760
    %v1164 = vsub.f32 %v1162, %v1163
    %v1165 = vand.u32 %v1164, 4294901760
    %1166 = vmatpush1.msra.mxu0 %v1165
    %1167 = vmatprep.subr.mxu0 0.0
    %v1168 = vand.u32 %v92, 4294901760
    %v1169 = vsub.f32 %v92, %v1168
    %v1170 = vand.u32 %v1169, 4294901760
    %v1171 = vsub.f32 %v1169, %v1170
    %v1172 = vand.u32 %v1171, 4294901760
    %1173 = vmatpush1.msra.mxu0 %v1172
    %1174 = vmatprep.subr.mxu0 0.0
    %1175 = vmatpush1.msra.mxu0 0.0
    %1176 = vmatprep.subr.mxu0 0.0
    %1177 = vmatpush1.msra.mxu0 0.0
    %1178 = vmatprep.subr.mxu0 0.0
    %1179 = vmatpush1.msra.mxu0 0.0
    %1180 = vmatprep.subr.mxu0 0.0
    %1181 = vmatpush1.msra.mxu0 0.0
    %1182 = vmatprep.subr.mxu0 0.0
    %1183 = vmatpush1.msra.mxu0 0.0
    %1184 = vmatprep.subr.mxu0 0.0
    %1185 = vmatpush1.msra.mxu0 0.0
    %1186 = vmatprep.subr.mxu0 0.0
    %1187 = vmatpush1.msra.mxu0 0.0
    %1188 = vmatprep.subr.mxu0 0.0
    %1189 = vmatpush1.msra.mxu0 0.0
    %1190 = vmatprep.subr.mxu0 0.0
    %1191 = vmatpush1.msra.mxu0 0.0
    %1192 = vmatprep.subr.mxu0 0.0
    %1193 = vmatpush1.msra.mxu0 0.0
    %1194 = vmatprep.subr.mxu0 0.0
    %1195 = vmatpush1.msra.mxu0 0.0
    %1196 = vmatprep.subr.mxu0 0.0
    %1197 = vmatpush1.msra.mxu0 0.0
    %1198 = vmatprep.subr.mxu0 0.0
    %1199 = vmatpush1.msra.mxu0 0.0
    %1200 = vmatprep.subr.mxu0 0.0
    %1201 = vmatpush1.msra.mxu0 0.0
    %1202 = vmatprep.subr.mxu0 0.0
    %1203 = vmatpush1.msra.mxu0 0.0
    %1204 = vmatprep.subr.mxu0 0.0
    %1205 = vmatpush1.msra.mxu0 0.0
    %1206 = vmatprep.mubr.f32.mxu0 0.0
    %v1207 = vand.u32 %v105, 4294901760
    %1208 = vmatmul.mubr.f32.gmra.mrb[0].mxu0 %v1207
    %v1209 = vpop.f32.mrb[0].mxu0
    %v1210 = vadd.f32 %v1059, %v1209
    %v1211 = vpop.f32.mrb[0].mxu0
    %1212 = vdwg.mxu0
    %1213 = vmatprep.subr.mxu0 0.0
    %v1214 = vand.u32 %v77, 4294901760
    %v1215 = vsub.f32 %v77, %v1214
    %1216 = vmatpush1.msra.mxu0 %v1215
    %1217 = vmatprep.subr.mxu0 0.0
    %v1218 = vand.u32 %v78, 4294901760
    %v1219 = vsub.f32 %v78, %v1218
    %1220 = vmatpush1.msra.mxu0 %v1219
    %1221 = vmatprep.subr.mxu0 0.0
    %v1222 = vand.u32 %v79, 4294901760
    %v1223 = vsub.f32 %v79, %v1222
    %1224 = vmatpush1.msra.mxu0 %v1223
    %1225 = vmatprep.subr.mxu0 0.0
    %v1226 = vand.u32 %v80, 4294901760
    %v1227 = vsub.f32 %v80, %v1226
    %1228 = vmatpush1.msra.mxu0 %v1227
    %1229 = vmatprep.subr.mxu0 0.0
    %v1230 = vand.u32 %v81, 4294901760
    %v1231 = vsub.f32 %v81, %v1230
    %1232 = vmatpush1.msra.mxu0 %v1231
    %1233 = vmatprep.subr.mxu0 0.0
    %v1234 = vand.u32 %v82, 4294901760
    %v1235 = vsub.f32 %v82, %v1234
    %1236 = vmatpush1.msra.mxu0 %v1235
    %1237 = vmatprep.subr.mxu0 0.0
    %v1238 = vand.u32 %v83, 4294901760
    %v1239 = vsub.f32 %v83, %v1238
    %1240 = vmatpush1.msra.mxu0 %v1239
    %1241 = vmatprep.subr.mxu0 0.0
    %v1242 = vand.u32 %v84, 4294901760
    %v1243 = vsub.f32 %v84, %v1242
    %1244 = vmatpush1.msra.mxu0 %v1243
    %1245 = vmatprep.subr.mxu0 0.0
    %v1246 = vand.u32 %v85, 4294901760
    %v1247 = vsub.f32 %v85, %v1246
    %1248 = vmatpush1.msra.mxu0 %v1247
    %1249 = vmatprep.subr.mxu0 0.0
    %v1250 = vand.u32 %v86, 4294901760
    %v1251 = vsub.f32 %v86, %v1250
    %1252 = vmatpush1.msra.mxu0 %v1251
    %1253 = vmatprep.subr.mxu0 0.0
    %v1254 = vand.u32 %v87, 4294901760
    %v1255 = vsub.f32 %v87, %v1254
    %1256 = vmatpush1.msra.mxu0 %v1255
    %1257 = vmatprep.subr.mxu0 0.0
    %v1258 = vand.u32 %v88, 4294901760
    %v1259 = vsub.f32 %v88, %v1258
    %1260 = vmatpush1.msra.mxu0 %v1259
    %1261 = vmatprep.subr.mxu0 0.0
    %v1262 = vand.u32 %v89, 4294901760
    %v1263 = vsub.f32 %v89, %v1262
    %1264 = vmatpush1.msra.mxu0 %v1263
    %1265 = vmatprep.subr.mxu0 0.0
    %v1266 = vand.u32 %v90, 4294901760
    %v1267 = vsub.f32 %v90, %v1266
    %1268 = vmatpush1.msra.mxu0 %v1267
    %1269 = vmatprep.subr.mxu0 0.0
    %v1270 = vand.u32 %v91, 4294901760
    %v1271 = vsub.f32 %v91, %v1270
    %1272 = vmatpush1.msra.mxu0 %v1271
    %1273 = vmatprep.subr.mxu0 0.0
    %v1274 = vand.u32 %v92, 4294901760
    %v1275 = vsub.f32 %v92, %v1274
    %1276 = vmatpush1.msra.mxu0 %v1275
    %1277 = vmatprep.subr.mxu0 0.0
    %1278 = vmatpush1.msra.mxu0 0.0
    %1279 = vmatprep.subr.mxu0 0.0
    %1280 = vmatpush1.msra.mxu0 0.0
    %1281 = vmatprep.subr.mxu0 0.0
    %1282 = vmatpush1.msra.mxu0 0.0
    %1283 = vmatprep.subr.mxu0 0.0
    %1284 = vmatpush1.msra.mxu0 0.0
    %1285 = vmatprep.subr.mxu0 0.0
    %1286 = vmatpush1.msra.mxu0 0.0
    %1287 = vmatprep.subr.mxu0 0.0
    %1288 = vmatpush1.msra.mxu0 0.0
    %1289 = vmatprep.subr.mxu0 0.0
    %1290 = vmatpush1.msra.mxu0 0.0
    %1291 = vmatprep.subr.mxu0 0.0
    %1292 = vmatpush1.msra.mxu0 0.0
    %1293 = vmatprep.subr.mxu0 0.0
    %1294 = vmatpush1.msra.mxu0 0.0
    %1295 = vmatprep.subr.mxu0 0.0
    %1296 = vmatpush1.msra.mxu0 0.0
    %1297 = vmatprep.subr.mxu0 0.0
    %1298 = vmatpush1.msra.mxu0 0.0
    %1299 = vmatprep.subr.mxu0 0.0
    %1300 = vmatpush1.msra.mxu0 0.0
    %1301 = vmatprep.subr.mxu0 0.0
    %1302 = vmatpush1.msra.mxu0 0.0
    %1303 = vmatprep.subr.mxu0 0.0
    %1304 = vmatpush1.msra.mxu0 0.0
    %1305 = vmatprep.subr.mxu0 0.0
    %1306 = vmatpush1.msra.mxu0 0.0
    %1307 = vmatprep.subr.mxu0 0.0
    %1308 = vmatpush1.msra.mxu0 0.0
    %1309 = vmatprep.mubr.f32.mxu0 0.0
    %v1310 = vand.u32 %v105, 4294901760
    %v1311 = vsub.f32 %v105, %v1310
    %1312 = vmatmul.mubr.f32.gmra.mrb[0].mxu0 %v1311
    %v1313 = vpop.f32.mrb[0].mxu0
    %v1314 = vadd.f32 %v1210, %v1313
    %v1315 = vpop.f32.mrb[0].mxu0
    %1316 = vdwg.mxu0
    %1317 = vmatprep.subr.mxu0 0.0
    %v1318 = vand.u32 %v77, 4294901760
    %1319 = vmatpush1.msra.mxu0 %v1318
    %1320 = vmatprep.subr.mxu0 0.0
    %v1321 = vand.u32 %v78, 4294901760
    %1322 = vmatpush1.msra.mxu0 %v1321
    %1323 = vmatprep.subr.mxu0 0.0
    %v1324 = vand.u32 %v79, 4294901760
    %1325 = vmatpush1.msra.mxu0 %v1324
    %1326 = vmatprep.subr.mxu0 0.0
    %v1327 = vand.u32 %v80, 4294901760
    %1328 = vmatpush1.msra.mxu0 %v1327
    %1329 = vmatprep.subr.mxu0 0.0
    %v1330 = vand.u32 %v81, 4294901760
    %1331 = vmatpush1.msra.mxu0 %v1330
    %1332 = vmatprep.subr.mxu0 0.0
    %v1333 = vand.u32 %v82, 4294901760
    %1334 = vmatpush1.msra.mxu0 %v1333
    %1335 = vmatprep.subr.mxu0 0.0
    %v1336 = vand.u32 %v83, 4294901760
    %1337 = vmatpush1.msra.mxu0 %v1336
    %1338 = vmatprep.subr.mxu0 0.0
    %v1339 = vand.u32 %v84, 4294901760
    %1340 = vmatpush1.msra.mxu0 %v1339
    %1341 = vmatprep.subr.mxu0 0.0
    %v1342 = vand.u32 %v85, 4294901760
    %1343 = vmatpush1.msra.mxu0 %v1342
    %1344 = vmatprep.subr.mxu0 0.0
    %v1345 = vand.u32 %v86, 4294901760
    %1346 = vmatpush1.msra.mxu0 %v1345
    %1347 = vmatprep.subr.mxu0 0.0
    %v1348 = vand.u32 %v87, 4294901760
    %1349 = vmatpush1.msra.mxu0 %v1348
    %1350 = vmatprep.subr.mxu0 0.0
    %v1351 = vand.u32 %v88, 4294901760
    %1352 = vmatpush1.msra.mxu0 %v1351
    %1353 = vmatprep.subr.mxu0 0.0
    %v1354 = vand.u32 %v89, 4294901760
    %1355 = vmatpush1.msra.mxu0 %v1354
    %1356 = vmatprep.subr.mxu0 0.0
    %v1357 = vand.u32 %v90, 4294901760
    %1358 = vmatpush1.msra.mxu0 %v1357
    %1359 = vmatprep.subr.mxu0 0.0
    %v1360 = vand.u32 %v91, 4294901760
    %1361 = vmatpush1.msra.mxu0 %v1360
    %1362 = vmatprep.subr.mxu0 0.0
    %v1363 = vand.u32 %v92, 4294901760
    %1364 = vmatpush1.msra.mxu0 %v1363
    %1365 = vmatprep.subr.mxu0 0.0
    %1366 = vmatpush1.msra.mxu0 0.0
    %1367 = vmatprep.subr.mxu0 0.0
    %1368 = vmatpush1.msra.mxu0 0.0
    %1369 = vmatprep.subr.mxu0 0.0
    %1370 = vmatpush1.msra.mxu0 0.0
    %1371 = vmatprep.subr.mxu0 0.0
    %1372 = vmatpush1.msra.mxu0 0.0
    %1373 = vmatprep.subr.mxu0 0.0
    %1374 = vmatpush1.msra.mxu0 0.0
    %1375 = vmatprep.subr.mxu0 0.0
    %1376 = vmatpush1.msra.mxu0 0.0
    %1377 = vmatprep.subr.mxu0 0.0
    %1378 = vmatpush1.msra.mxu0 0.0
    %1379 = vmatprep.subr.mxu0 0.0
    %1380 = vmatpush1.msra.mxu0 0.0
    %1381 = vmatprep.subr.mxu0 0.0
    %1382 = vmatpush1.msra.mxu0 0.0
    %1383 = vmatprep.subr.mxu0 0.0
    %1384 = vmatpush1.msra.mxu0 0.0
    %1385 = vmatprep.subr.mxu0 0.0
    %1386 = vmatpush1.msra.mxu0 0.0
    %1387 = vmatprep.subr.mxu0 0.0
    %1388 = vmatpush1.msra.mxu0 0.0
    %1389 = vmatprep.subr.mxu0 0.0
    %1390 = vmatpush1.msra.mxu0 0.0
    %1391 = vmatprep.subr.mxu0 0.0
    %1392 = vmatpush1.msra.mxu0 0.0
    %1393 = vmatprep.subr.mxu0 0.0
    %1394 = vmatpush1.msra.mxu0 0.0
    %1395 = vmatprep.subr.mxu0 0.0
    %1396 = vmatpush1.msra.mxu0 0.0
    %1397 = vmatprep.mubr.f32.mxu0 0.0
    %v1398 = vand.u32 %v105, 4294901760
    %v1399 = vsub.f32 %v105, %v1398
    %v1400 = vand.u32 %v1399, 4294901760
    %1401 = vmatmul.mubr.f32.gmra.mrb[0].mxu0 %v1400
    %v1402 = vpop.f32.mrb[0].mxu0
    %v1403 = vadd.f32 %v1314, %v1402
    %v1404 = vpop.f32.mrb[0].mxu0
    %1405 = vdwg.mxu0
    %1406 = vmatprep.subr.mxu0 0.0
    %v1407 = vand.u32 %v77, 4294901760
    %v1408 = vsub.f32 %v77, %v1407
    %v1409 = vand.u32 %v1408, 4294901760
    %1410 = vmatpush1.msra.mxu0 %v1409
    %1411 = vmatprep.subr.mxu0 0.0
    %v1412 = vand.u32 %v78, 4294901760
    %v1413 = vsub.f32 %v78, %v1412
    %v1414 = vand.u32 %v1413, 4294901760
    %1415 = vmatpush1.msra.mxu0 %v1414
    %1416 = vmatprep.subr.mxu0 0.0
    %v1417 = vand.u32 %v79, 4294901760
    %v1418 = vsub.f32 %v79, %v1417
    %v1419 = vand.u32 %v1418, 4294901760
    %1420 = vmatpush1.msra.mxu0 %v1419
    %1421 = vmatprep.subr.mxu0 0.0
    %v1422 = vand.u32 %v80, 4294901760
    %v1423 = vsub.f32 %v80, %v1422
    %v1424 = vand.u32 %v1423, 4294901760
    %1425 = vmatpush1.msra.mxu0 %v1424
    %1426 = vmatprep.subr.mxu0 0.0
    %v1427 = vand.u32 %v81, 4294901760
    %v1428 = vsub.f32 %v81, %v1427
    %v1429 = vand.u32 %v1428, 4294901760
    %1430 = vmatpush1.msra.mxu0 %v1429
    %1431 = vmatprep.subr.mxu0 0.0
    %v1432 = vand.u32 %v82, 4294901760
    %v1433 = vsub.f32 %v82, %v1432
    %v1434 = vand.u32 %v1433, 4294901760
    %1435 = vmatpush1.msra.mxu0 %v1434
    %1436 = vmatprep.subr.mxu0 0.0
    %v1437 = vand.u32 %v83, 4294901760
    %v1438 = vsub.f32 %v83, %v1437
    %v1439 = vand.u32 %v1438, 4294901760
    %1440 = vmatpush1.msra.mxu0 %v1439
    %1441 = vmatprep.subr.mxu0 0.0
    %v1442 = vand.u32 %v84, 4294901760
    %v1443 = vsub.f32 %v84, %v1442
    %v1444 = vand.u32 %v1443, 4294901760
    %1445 = vmatpush1.msra.mxu0 %v1444
    %1446 = vmatprep.subr.mxu0 0.0
    %v1447 = vand.u32 %v85, 4294901760
    %v1448 = vsub.f32 %v85, %v1447
    %v1449 = vand.u32 %v1448, 4294901760
    %1450 = vmatpush1.msra.mxu0 %v1449
    %1451 = vmatprep.subr.mxu0 0.0
    %v1452 = vand.u32 %v86, 4294901760
    %v1453 = vsub.f32 %v86, %v1452
    %v1454 = vand.u32 %v1453, 4294901760
    %1455 = vmatpush1.msra.mxu0 %v1454
    %1456 = vmatprep.subr.mxu0 0.0
    %v1457 = vand.u32 %v87, 4294901760
    %v1458 = vsub.f32 %v87, %v1457
    %v1459 = vand.u32 %v1458, 4294901760
    %1460 = vmatpush1.msra.mxu0 %v1459
    %1461 = vmatprep.subr.mxu0 0.0
    %v1462 = vand.u32 %v88, 4294901760
    %v1463 = vsub.f32 %v88, %v1462
    %v1464 = vand.u32 %v1463, 4294901760
    %1465 = vmatpush1.msra.mxu0 %v1464
    %1466 = vmatprep.subr.mxu0 0.0
    %v1467 = vand.u32 %v89, 4294901760
    %v1468 = vsub.f32 %v89, %v1467
    %v1469 = vand.u32 %v1468, 4294901760
    %1470 = vmatpush1.msra.mxu0 %v1469
    %1471 = vmatprep.subr.mxu0 0.0
    %v1472 = vand.u32 %v90, 4294901760
    %v1473 = vsub.f32 %v90, %v1472
    %v1474 = vand.u32 %v1473, 4294901760
    %1475 = vmatpush1.msra.mxu0 %v1474
    %1476 = vmatprep.subr.mxu0 0.0
    %v1477 = vand.u32 %v91, 4294901760
    %v1478 = vsub.f32 %v91, %v1477
    %v1479 = vand.u32 %v1478, 4294901760
    %1480 = vmatpush1.msra.mxu0 %v1479
    %1481 = vmatprep.subr.mxu0 0.0
    %v1482 = vand.u32 %v92, 4294901760
    %v1483 = vsub.f32 %v92, %v1482
    %v1484 = vand.u32 %v1483, 4294901760
    %1485 = vmatpush1.msra.mxu0 %v1484
    %1486 = vmatprep.subr.mxu0 0.0
    %1487 = vmatpush1.msra.mxu0 0.0
    %1488 = vmatprep.subr.mxu0 0.0
    %1489 = vmatpush1.msra.mxu0 0.0
    %1490 = vmatprep.subr.mxu0 0.0
    %1491 = vmatpush1.msra.mxu0 0.0
    %1492 = vmatprep.subr.mxu0 0.0
    %1493 = vmatpush1.msra.mxu0 0.0
    %1494 = vmatprep.subr.mxu0 0.0
    %1495 = vmatpush1.msra.mxu0 0.0
    %1496 = vmatprep.subr.mxu0 0.0
    %1497 = vmatpush1.msra.mxu0 0.0
    %1498 = vmatprep.subr.mxu0 0.0
    %1499 = vmatpush1.msra.mxu0 0.0
    %1500 = vmatprep.subr.mxu0 0.0
    %1501 = vmatpush1.msra.mxu0 0.0
    %1502 = vmatprep.subr.mxu0 0.0
    %1503 = vmatpush1.msra.mxu0 0.0
    %1504 = vmatprep.subr.mxu0 0.0
    %1505 = vmatpush1.msra.mxu0 0.0
    %1506 = vmatprep.subr.mxu0 0.0
    %1507 = vmatpush1.msra.mxu0 0.0
    %1508 = vmatprep.subr.mxu0 0.0
    %1509 = vmatpush1.msra.mxu0 0.0
    %1510 = vmatprep.subr.mxu0 0.0
    %1511 = vmatpush1.msra.mxu0 0.0
    %1512 = vmatprep.subr.mxu0 0.0
    %1513 = vmatpush1.msra.mxu0 0.0
    %1514 = vmatprep.subr.mxu0 0.0
    %1515 = vmatpush1.msra.mxu0 0.0
    %1516 = vmatprep.subr.mxu0 0.0
    %1517 = vmatpush1.msra.mxu0 0.0
    %1518 = vmatprep.mubr.f32.mxu0 0.0
    %v1519 = vand.u32 %v105, 4294901760
    %1520 = vmatmul.mubr.f32.gmra.mrb[0].mxu0 %v1519
    %v1521 = vpop.f32.mrb[0].mxu0
    %v1522 = vadd.f32 %v1403, %v1521
    %v1523 = vpop.f32.mrb[0].mxu0
    %1524 = vdwg.mxu0
    %1525 = vmatprep.subr.mxu0 0.0
    %v1526 = vand.u32 %v77, 4294901760
    %1527 = vmatpush1.msra.mxu0 %v1526
    %1528 = vmatprep.subr.mxu0 0.0
    %v1529 = vand.u32 %v78, 4294901760
    %1530 = vmatpush1.msra.mxu0 %v1529
    %1531 = vmatprep.subr.mxu0 0.0
    %v1532 = vand.u32 %v79, 4294901760
    %1533 = vmatpush1.msra.mxu0 %v1532
    %1534 = vmatprep.subr.mxu0 0.0
    %v1535 = vand.u32 %v80, 4294901760
    %1536 = vmatpush1.msra.mxu0 %v1535
    %1537 = vmatprep.subr.mxu0 0.0
    %v1538 = vand.u32 %v81, 4294901760
    %1539 = vmatpush1.msra.mxu0 %v1538
    %1540 = vmatprep.subr.mxu0 0.0
    %v1541 = vand.u32 %v82, 4294901760
    %1542 = vmatpush1.msra.mxu0 %v1541
    %1543 = vmatprep.subr.mxu0 0.0
    %v1544 = vand.u32 %v83, 4294901760
    %1545 = vmatpush1.msra.mxu0 %v1544
    %1546 = vmatprep.subr.mxu0 0.0
    %v1547 = vand.u32 %v84, 4294901760
    %1548 = vmatpush1.msra.mxu0 %v1547
    %1549 = vmatprep.subr.mxu0 0.0
    %v1550 = vand.u32 %v85, 4294901760
    %1551 = vmatpush1.msra.mxu0 %v1550
    %1552 = vmatprep.subr.mxu0 0.0
    %v1553 = vand.u32 %v86, 4294901760
    %1554 = vmatpush1.msra.mxu0 %v1553
    %1555 = vmatprep.subr.mxu0 0.0
    %v1556 = vand.u32 %v87, 4294901760
    %1557 = vmatpush1.msra.mxu0 %v1556
    %1558 = vmatprep.subr.mxu0 0.0
    %v1559 = vand.u32 %v88, 4294901760
    %1560 = vmatpush1.msra.mxu0 %v1559
    %1561 = vmatprep.subr.mxu0 0.0
    %v1562 = vand.u32 %v89, 4294901760
    %1563 = vmatpush1.msra.mxu0 %v1562
    %1564 = vmatprep.subr.mxu0 0.0
    %v1565 = vand.u32 %v90, 4294901760
    %1566 = vmatpush1.msra.mxu0 %v1565
    %1567 = vmatprep.subr.mxu0 0.0
    %v1568 = vand.u32 %v91, 4294901760
    %1569 = vmatpush1.msra.mxu0 %v1568
    %1570 = vmatprep.subr.mxu0 0.0
    %v1571 = vand.u32 %v92, 4294901760
    %1572 = vmatpush1.msra.mxu0 %v1571
    %1573 = vmatprep.subr.mxu0 0.0
    %1574 = vmatpush1.msra.mxu0 0.0
    %1575 = vmatprep.subr.mxu0 0.0
    %1576 = vmatpush1.msra.mxu0 0.0
    %1577 = vmatprep.subr.mxu0 0.0
    %1578 = vmatpush1.msra.mxu0 0.0
    %1579 = vmatprep.subr.mxu0 0.0
    %1580 = vmatpush1.msra.mxu0 0.0
    %1581 = vmatprep.subr.mxu0 0.0
    %1582 = vmatpush1.msra.mxu0 0.0
    %1583 = vmatprep.subr.mxu0 0.0
    %1584 = vmatpush1.msra.mxu0 0.0
    %1585 = vmatprep.subr.mxu0 0.0
    %1586 = vmatpush1.msra.mxu0 0.0
    %1587 = vmatprep.subr.mxu0 0.0
    %1588 = vmatpush1.msra.mxu0 0.0
    %1589 = vmatprep.subr.mxu0 0.0
    %1590 = vmatpush1.msra.mxu0 0.0
    %1591 = vmatprep.subr.mxu0 0.0
    %1592 = vmatpush1.msra.mxu0 0.0
    %1593 = vmatprep.subr.mxu0 0.0
    %1594 = vmatpush1.msra.mxu0 0.0
    %1595 = vmatprep.subr.mxu0 0.0
    %1596 = vmatpush1.msra.mxu0 0.0
    %1597 = vmatprep.subr.mxu0 0.0
    %1598 = vmatpush1.msra.mxu0 0.0
    %1599 = vmatprep.subr.mxu0 0.0
    %1600 = vmatpush1.msra.mxu0 0.0
    %1601 = vmatprep.subr.mxu0 0.0
    %1602 = vmatpush1.msra.mxu0 0.0
    %1603 = vmatprep.subr.mxu0 0.0
    %1604 = vmatpush1.msra.mxu0 0.0
    %1605 = vmatprep.mubr.f32.mxu0 0.0
    %v1606 = vand.u32 %v105, 4294901760
    %1607 = vmatmul.mubr.f32.gmra.mrb[0].mxu0 %v1606
    %v1608 = vpop.f32.mrb[0].mxu0
    %v1609 = vadd.f32 %v1522, %v1608
    %v1610 = vpop.f32.mrb[0].mxu0
    %1611 = vdwg.mxu0
    %v1612 = vrsqrt.pop %v1609
    %v1613 = vmul.f32 %v1609, %v1612
    %vm1614 = vcmp.eq.f32.partialorder %v1609, inf
    %v1615 = vsel %vm1614, %v1609, %v1613
    %vm1616 = vcmp.eq.f32.partialorder %v1609, 0.0
    %v1617 = vand.u32 %v1609, 2147483648
    %v1618 = vsel %vm1616, %v1617, %v1615
    %v1619 = vadd.f32 %v1618, 0.0
    %1620 = vst [vmem:[#allocation7] sm:$0x1] %v1619
    // Predicated region
    $region22: #{tpu_custom_call.1} parent=1 // pred_check
      _
    $region23: #{tpu_custom_call.1} parent=1 // pred_check_branch
      %1622 = sbr.rel (0) target = $region25
    $region24: #{tpu_custom_call.1} parent=1 // pred_region
      %s1624 = ssub.s32 16, 16
      %1625 = vsyncadd [#allocation4], %s1624
      %s1627 = sshll.u32 [#allocation7], 4
      %s1628 = int_to_ptr.vmem [resolvable:$true] %s1627
      %1630 = dma.vmem_to_hbm [thread:$0]  %s1628, 16, %s3, [#allocation4]
    $region25: #{tpu_custom_call.1} parent=1 // pred_fallthru
      _
    // Predicated region
    $region26: #{tpu_custom_call.1} parent=1 // pred_check
      _
    $region27: #{tpu_custom_call.1} parent=1 // pred_check_branch
      %1632 = sbr.rel (0) target = $region29
    $region28: #{tpu_custom_call.1} parent=1 // pred_region
      %1633 = dma.done [#allocation4], 16
    $region29: #{tpu_custom_call.1} parent=1 // pred_fallthru
      _
    %1634 = vsyncpa [#allocation3], 1
    %1635 = vsyncpa [#allocation6], 1
    %1636 = vsyncpa [#allocation4], 1

</llo_original>
